<compile_context>
chip_gen: v7x
topology: tpu7x:2x2x1
jax: 0.10.0
libtpu: 0.0.40
codegen_flags: <defaults>
</compile_context>

<pallas_src>
import jax
import jax.numpy as jnp
from jax.experimental import pallas as pl
from jax.experimental.pallas import tpu as pltpu

# ----------------------------- config (small) -----------------------------
VOCAB = 100
VOCAB_PAD = 128            # padded embedding-table rows (one-hot matmul gather)
BATCH = 2
SEQ = 8
BS = BATCH * SEQ
HIDDEN = 32
NUM_HEADS = 4
HEAD_DIM = HIDDEN // NUM_HEADS
FFN = 64
NUM_LAYERS = 2
NUM_CLASSES = 3
PAD_IDX = 0
LN_EPS = 1e-12
LOGIT_PAD = 128            # lane-dense classifier output width

MXU_DTYPE = jnp.bfloat16   # bf16 MXU operands (native v6e/v7x, fine on v5e)

# ---- packed bf16 weight slab: columns [Wqkv | Wo | W1 | W2^T | clsW_pad] ----
OFF_QKV = 0
OFF_WO = OFF_QKV + 3 * HIDDEN          # 96
OFF_W1 = OFF_WO + HIDDEN               # 128
OFF_W2T = OFF_W1 + FFN                 # 192
OFF_CLS = OFF_W2T + FFN                # 256
SLAB_W = OFF_CLS + LOGIT_PAD           # 384

# ---- packed f32 vector array (N_VEC, 128): biases, LN params, pos-emb ----
VEC_W = 128
ROW_EMB_G, ROW_EMB_B = 0, 1
ROW_BQKV = 2                           # lanes 0:96  = [bq|bk|bv]
ROW_BO = 3
ROW_LN1_G, ROW_LN1_B = 4, 5
ROW_B1 = 6                             # lanes 0:FFN
ROW_B2 = 7
ROW_LN2_G, ROW_LN2_B = 8, 9
ROW_CLS_B = 10                         # lanes 0:NUM_CLASSES (rest zero)
ROW_POS = 11                           # rows ROW_POS .. ROW_POS+BS-1, lanes 0:H
N_VEC = ROW_POS + BS


# ----------------------------- fused kernel --------------------------------
def bert_fused_kernel(ids_ref, bias_ref, tok_ref, slab_ref, vec_ref,
                      layers_ref, logits_ref):
    """Full BERT forward for the whole (folded) batch in one invocation."""
    f32 = jnp.float32

    def _ln(y, g, b):
        mu = jnp.mean(y, axis=-1, keepdims=True)
        var = jnp.mean(jnp.square(y - mu), axis=-1, keepdims=True)
        return (y - mu) * jax.lax.rsqrt(var + LN_EPS) * g + b

    # -------- packed f32 vectors --------
    vecs = vec_ref[...]                                   # (N_VEC, 128) f32

    def vrow(r, w=HIDDEN):
        return vecs[r:r + 1, 0:w]                         # (1, w)

    g_emb, b_emb = vrow(ROW_EMB_G), vrow(ROW_EMB_B)
    b_qkv = vrow(ROW_BQKV, 3 * HIDDEN)                    # (1, 96)
    b_o = vrow(ROW_BO)
    g1, be1 = vrow(ROW_LN1_G), vrow(ROW_LN1_B)
    b1 = vrow(ROW_B1, FFN)                                # (1, 64)
    b2 = vrow(ROW_B2)
    g2, be2 = vrow(ROW_LN2_G), vrow(ROW_LN2_B)
    cls_b = vrow(ROW_CLS_B, LOGIT_PAD)                    # (1, 128)
    pos = vecs[ROW_POS:ROW_POS + BS, 0:HIDDEN]            # (BS, H), already tiled

    # -------- packed bf16 weight slab --------
    slab = slab_ref[...]                                  # (H, 384) bf16
    w_qkv = slab[:, OFF_QKV:OFF_QKV + 3 * HIDDEN]         # (H, 3H)
    w_o = slab[:, OFF_WO:OFF_WO + HIDDEN]                 # (H, H)
    w_1 = slab[:, OFF_W1:OFF_W1 + FFN]                    # (H, FFN)
    w_2t = slab[:, OFF_W2T:OFF_W2T + FFN]                 # (H, FFN) == W2^T
    cls_w = slab[:, OFF_CLS:OFF_CLS + LOGIT_PAD]          # (H, 128)

    # -------- additive attention bias (block-diag over batch + padding) -----
    attn_bias = bias_ref[...]                             # (BS, BS) f32

    # -------- token embedding: one-hot gather via MXU (exact selection) -----
    ids = ids_ref[...]                                    # (BS, 1) int32
    onehot = (jax.lax.broadcasted_iota(jnp.int32, (BS, VOCAB_PAD), 1)
              == ids).astype(f32)                         # (BS, 128)
    x = jnp.dot(onehot, tok_ref[...], preferred_element_type=f32) + pos
    x = _ln(x, g_emb, b_emb)                              # (BS, H)

    scale = 1.0 / (HEAD_DIM ** 0.5)

    def encoder_layer(x):
        xm = x.astype(MXU_DTYPE)                          # (BS, H)

        # Fused QKV projection: ONE matmul, 96 output lanes.
        qkv = jnp.dot(xm, w_qkv, preferred_element_type=f32) + b_qkv   # (BS, 3H)

        # Per-head attention over the folded batch; cross-batch / padding keys
        # are masked by attn_bias (-1e9) so softmax is effectively per-batch.
        ctx_heads = []
        for h in range(NUM_HEADS):
            lo = h * HEAD_DIM
            q_h = qkv[:, lo:lo + HEAD_DIM].astype(MXU_DTYPE)
            k_h = qkv[:, HIDDEN + lo:HIDDEN + lo + HEAD_DIM].astype(MXU_DTYPE)
            v_h = qkv[:, 2 * HIDDEN + lo:2 * HIDDEN + lo + HEAD_DIM].astype(MXU_DTYPE)

            s = jax.lax.dot_general(q_h, k_h, (((1,), (1,)), ((), ())),
                                    preferred_element_type=f32) * scale  # (BS,BS)
            s = s + attn_bias
            s = s - jnp.max(s, axis=-1, keepdims=True)
            p = jnp.exp(s)
            p = p * pl.reciprocal(jnp.sum(p, axis=-1, keepdims=True), approx=True)
            ctx_heads.append(jnp.dot(p.astype(MXU_DTYPE), v_h,
                                     preferred_element_type=f32))        # (BS,HD)

        # Lane-concat heads back to (BS, H); output projection is ONE matmul.
        ctx = jnp.concatenate(ctx_heads, axis=1)
        attn = jnp.dot(ctx.astype(MXU_DTYPE), w_o, preferred_element_type=f32) + b_o

        # residual + LN 1
        h1 = _ln(x + attn, g1, be1)

        # feed-forward
        ff = jnp.dot(h1.astype(MXU_DTYPE), w_1, preferred_element_type=f32) + b1
        # TODO(synk): PyTorch nn.GELU defaults to exact erf GELU; tanh
        # approximation used here (erf lowering in-kernel is not relied upon).
        ff = jax.nn.gelu(ff, approximate=True)
        ff = jax.lax.dot_general(ff.astype(MXU_DTYPE), w_2t,
                                 (((1,), (1,)), ((), ())),
                                 preferred_element_type=f32) + b2

        # residual + LN 2
        return _ln(h1 + ff, g2, be2)

    # Shared weights across layers -> static unroll inside the single kernel.
    for li in range(NUM_LAYERS):
        x = encoder_layer(x)
        layers_ref[li] = x.astype(layers_ref.dtype)

    # Classifier (padded to 128 lanes -> unmasked store); computed on all rows,
    # the wrapper selects the [CLS] (position-0) rows and first NUM_CLASSES cols.
    logits = jnp.dot(x.astype(MXU_DTYPE), cls_w, preferred_element_type=f32) + cls_b
    logits_ref[...] = logits.astype(logits_ref.dtype)


# ----------------------------- wrappers -------------------------------------
def _full_spec(shape):
    nd = len(shape)
    return pl.BlockSpec(shape, lambda i, _nd=nd: (0,) * _nd)


def _pack_params(p):
    """Pack params into: padded f32 emb table, one bf16 weight slab, one f32 vec array."""
    H = HIDDEN

    # bf16 weight slab (H, SLAB_W) = [Wq|Wk|Wv | Wo | W1 | W2^T | clsW_pad]
    cls_w_pad = jnp.zeros((H, LOGIT_PAD), jnp.float32).at[:, :NUM_CLASSES].set(p["cls_w"])
    slab = jnp.concatenate(
        [p["wq"], p["wk"], p["wv"], p["wo"], p["w1"], p["w2"].T, cls_w_pad],
        axis=1).astype(MXU_DTYPE)                          # (H, 384)

    # f32 vector pack (N_VEC, 128)
    def row(v):
        v = jnp.asarray(v, jnp.float32).reshape(-1)
        return jnp.zeros((VEC_W,), jnp.float32).at[:v.shape[0]].set(v)

    rows = jnp.stack([
        row(p["emb_ln_g"]), row(p["emb_ln_b"]),
        row(jnp.concatenate([p["bq"], p["bk"], p["bv"]])),
        row(p["bo"]),
        row(p["ln1_g"]), row(p["ln1_b"]),
        row(p["b1"]),
        row(p["b2"]),
        row(p["ln2_g"]), row(p["ln2_b"]),
        row(p["cls_b"]),
    ])                                                     # (11, 128)
    pos_t = jnp.tile(p["pos_emb"], (BATCH, 1))             # (BS, H)
    pos_rows = jnp.zeros((BS, VEC_W), jnp.float32).at[:, :H].set(pos_t)
    vecs = jnp.concatenate([rows, pos_rows], axis=0)       # (N_VEC, 128)

    tok_pad = jnp.zeros((VOCAB_PAD, H), jnp.float32).at[:VOCAB, :].set(p["tok_emb"])

    return dict(slab=slab, vecs=vecs, tok=tok_pad)


def bert_forward(input_ids, params, attention_mask=None, return_all_layers=True):
    B, S = input_ids.shape
    assert (B, S) == (BATCH, SEQ)

    if attention_mask is None:
        key_valid = (input_ids != PAD_IDX).reshape(BS)
    else:
        key_valid = (jnp.asarray(attention_mask).reshape(B, S) != 0).reshape(BS)

    # Block-diagonal (same-batch) + key-padding additive bias for the folded batch.
    batch_ix = jnp.repeat(jnp.arange(B), S)                # (BS,)
    same_b = batch_ix[:, None] == batch_ix[None, :]
    attn_bias = jnp.where(same_b & key_valid[None, :], 0.0, -1e9).astype(jnp.float32)

    ids = input_ids.reshape(BS, 1).astype(jnp.int32)

    kp = _pack_params(params)

    layers, logits_all = pl.pallas_call(
        bert_fused_kernel,
        out_shape=(
            jax.ShapeDtypeStruct((NUM_LAYERS, BS, HIDDEN), jnp.float32),
            jax.ShapeDtypeStruct((BS, LOGIT_PAD), jnp.float32),
        ),
        grid=(1,),
        in_specs=[
            _full_spec((BS, 1)),                    # input ids
            _full_spec((BS, BS)),                   # additive attention bias
            _full_spec((VOCAB_PAD, HIDDEN)),        # padded token-embedding table
            _full_spec((HIDDEN, SLAB_W)),           # packed bf16 weights
            _full_spec((N_VEC, VEC_W)),             # packed f32 vectors + pos emb
        ],
        out_specs=(
            _full_spec((NUM_LAYERS, BS, HIDDEN)),
            _full_spec((BS, LOGIT_PAD)),
        ),
        compiler_params=pltpu.CompilerParams(dimension_semantics=("arbitrary",)),
    )(ids, attn_bias, kp["tok"], kp["slab"], kp["vecs"])

    # [CLS] logits: position-0 row of each batch, first NUM_CLASSES lanes.
    logits = logits_all.reshape(B, S, LOGIT_PAD)[:, 0, :NUM_CLASSES]
    layers_b = layers.reshape(NUM_LAYERS, B, S, HIDDEN)
    if return_all_layers:
        all_layers = [layers_b[i] for i in range(NUM_LAYERS)]
    else:
        all_layers = [layers_b[NUM_LAYERS - 1]]
    return logits, all_layers


def init_params(key):
    ks = jax.random.split(key, 16)
    n = lambda k, shape: (0.02 * jax.random.normal(k, shape)).astype(jnp.float32)
    return {
        "tok_emb": n(ks[0], (VOCAB, HIDDEN)),
        "pos_emb": n(ks[1], (SEQ, HIDDEN)),
        "emb_ln_g": jnp.ones((HIDDEN,), jnp.float32),
        "emb_ln_b": jnp.zeros((HIDDEN,), jnp.float32),
        "wq": n(ks[2], (HIDDEN, HIDDEN)), "bq": jnp.zeros((HIDDEN,), jnp.float32),
        "wk": n(ks[3], (HIDDEN, HIDDEN)), "bk": jnp.zeros((HIDDEN,), jnp.float32),
        "wv": n(ks[4], (HIDDEN, HIDDEN)), "bv": jnp.zeros((HIDDEN,), jnp.float32),
        "wo": n(ks[5], (HIDDEN, HIDDEN)), "bo": jnp.zeros((HIDDEN,), jnp.float32),
        "ln1_g": jnp.ones((HIDDEN,), jnp.float32),
        "ln1_b": jnp.zeros((HIDDEN,), jnp.float32),
        "w1": n(ks[6], (HIDDEN, FFN)), "b1": jnp.zeros((FFN,), jnp.float32),
        "w2": n(ks[7], (FFN, HIDDEN)), "b2": jnp.zeros((HIDDEN,), jnp.float32),
        "ln2_g": jnp.ones((HIDDEN,), jnp.float32),
        "ln2_b": jnp.zeros((HIDDEN,), jnp.float32),
        "cls_w": n(ks[8], (HIDDEN, NUM_CLASSES)),
        "cls_b": jnp.zeros((NUM_CLASSES,), jnp.float32),
    }


# ------------------------------- main ---------------------------------------
if __name__ == "__main__":
    key = jax.random.PRNGKey(0)
    k_ids, k_params = jax.random.split(key)
    input_ids = jax.random.randint(k_ids, (BATCH, SEQ), minval=0, maxval=VOCAB,
                                   dtype=jnp.int32)
    params = init_params(k_params)

    logits, all_layers = bert_forward(input_ids, params)
    jax.block_until_ready(logits)
    jax.block_until_ready(all_layers)

    assert logits.shape == (BATCH, NUM_CLASSES)
    assert len(all_layers) == NUM_LAYERS
    assert all_layers[-1].shape == (BATCH, SEQ, HIDDEN)
    assert bool(jnp.all(jnp.isfinite(logits)))
    assert bool(jnp.all(jnp.isfinite(all_layers[-1])))
    print("KERNEL_OK")
</pallas_src>

<mosaic_0001>
module attributes {stable_mosaic.version = 11 : i64} {
  func.func @bert_fused_kernel(%arg0: i32, %arg1: memref<16x1xi32, #tpu.memory_space<vmem>>, %arg2: memref<16x16xf32, #tpu.memory_space<vmem>>, %arg3: memref<128x32xf32, #tpu.memory_space<vmem>>, %arg4: memref<32x384xbf16, #tpu.memory_space<vmem>>, %arg5: memref<27x128xf32, #tpu.memory_space<vmem>>, %arg6: memref<2x16x32xf32, #tpu.memory_space<vmem>>, %arg7: memref<16x128xf32, #tpu.memory_space<vmem>>) attributes {dimension_semantics = [#tpu.dimension_semantics<arbitrary>], iteration_bounds = array<i64: 1>, scalar_prefetch = 0 : i64, scratch_operands = 0 : i64, tpu.core_type = #tpu.core_type<tc>, window_params = [{pipeline_mode = #tpu.pipeline_mode<synchronous>, transform_indices = @transform_0, window_bounds = array<i64: 16, 1>}, {pipeline_mode = #tpu.pipeline_mode<synchronous>, transform_indices = @transform_1, window_bounds = array<i64: 16, 16>}, {pipeline_mode = #tpu.pipeline_mode<synchronous>, transform_indices = @transform_2, window_bounds = array<i64: 128, 32>}, {pipeline_mode = #tpu.pipeline_mode<synchronous>, transform_indices = @transform_3, window_bounds = array<i64: 32, 384>}, {pipeline_mode = #tpu.pipeline_mode<synchronous>, transform_indices = @transform_4, window_bounds = array<i64: 27, 128>}, {pipeline_mode = #tpu.pipeline_mode<synchronous>, transform_indices = @transform_5, window_bounds = array<i64: 2, 16, 32>}, {pipeline_mode = #tpu.pipeline_mode<synchronous>, transform_indices = @transform_6, window_bounds = array<i64: 16, 128>}]} {
    %c0 = arith.constant 0 : index
    %c0_0 = arith.constant 0 : index
    %0 = vector.load %arg5[%c0, %c0_0] : memref<27x128xf32, #tpu.memory_space<vmem>>, vector<27x128xf32>
    %1 = vector.extract_strided_slice %0 {offsets = [0, 0], sizes = [1, 32], strides = [1, 1]} : vector<27x128xf32> to vector<1x32xf32>
    %2 = vector.extract_strided_slice %0 {offsets = [1, 0], sizes = [1, 32], strides = [1, 1]} : vector<27x128xf32> to vector<1x32xf32>
    %3 = vector.extract_strided_slice %0 {offsets = [2, 0], sizes = [1, 96], strides = [1, 1]} : vector<27x128xf32> to vector<1x96xf32>
    %4 = vector.extract_strided_slice %0 {offsets = [3, 0], sizes = [1, 32], strides = [1, 1]} : vector<27x128xf32> to vector<1x32xf32>
    %5 = vector.extract_strided_slice %0 {offsets = [4, 0], sizes = [1, 32], strides = [1, 1]} : vector<27x128xf32> to vector<1x32xf32>
    %6 = vector.extract_strided_slice %0 {offsets = [5, 0], sizes = [1, 32], strides = [1, 1]} : vector<27x128xf32> to vector<1x32xf32>
    %7 = vector.extract_strided_slice %0 {offsets = [6, 0], sizes = [1, 64], strides = [1, 1]} : vector<27x128xf32> to vector<1x64xf32>
    %8 = vector.extract_strided_slice %0 {offsets = [7, 0], sizes = [1, 32], strides = [1, 1]} : vector<27x128xf32> to vector<1x32xf32>
    %9 = vector.extract_strided_slice %0 {offsets = [8, 0], sizes = [1, 32], strides = [1, 1]} : vector<27x128xf32> to vector<1x32xf32>
    %10 = vector.extract_strided_slice %0 {offsets = [9, 0], sizes = [1, 32], strides = [1, 1]} : vector<27x128xf32> to vector<1x32xf32>
    %11 = vector.extract_strided_slice %0 {offsets = [10, 0], sizes = [1, 128], strides = [1, 1]} : vector<27x128xf32> to vector<1x128xf32>
    %12 = vector.extract_strided_slice %0 {offsets = [11, 0], sizes = [16, 32], strides = [1, 1]} : vector<27x128xf32> to vector<16x32xf32>
    %c0_1 = arith.constant 0 : index
    %c0_2 = arith.constant 0 : index
    %13 = vector.load %arg4[%c0_1, %c0_2] : memref<32x384xbf16, #tpu.memory_space<vmem>>, vector<32x384xbf16>
    %14 = vector.extract_strided_slice %13 {offsets = [0, 0], sizes = [32, 96], strides = [1, 1]} : vector<32x384xbf16> to vector<32x96xbf16>
    %15 = vector.extract_strided_slice %13 {offsets = [0, 96], sizes = [32, 32], strides = [1, 1]} : vector<32x384xbf16> to vector<32x32xbf16>
    %16 = vector.extract_strided_slice %13 {offsets = [0, 128], sizes = [32, 64], strides = [1, 1]} : vector<32x384xbf16> to vector<32x64xbf16>
    %17 = vector.extract_strided_slice %13 {offsets = [0, 192], sizes = [32, 64], strides = [1, 1]} : vector<32x384xbf16> to vector<32x64xbf16>
    %18 = vector.extract_strided_slice %13 {offsets = [0, 256], sizes = [32, 128], strides = [1, 1]} : vector<32x384xbf16> to vector<32x128xbf16>
    %c0_3 = arith.constant 0 : index
    %c0_4 = arith.constant 0 : index
    %19 = vector.load %arg2[%c0_3, %c0_4] : memref<16x16xf32, #tpu.memory_space<vmem>>, vector<16x16xf32>
    %c0_5 = arith.constant 0 : index
    %c0_6 = arith.constant 0 : index
    %20 = vector.load %arg1[%c0_5, %c0_6] : memref<16x1xi32, #tpu.memory_space<vmem>>, vector<16x1xi32>
    %21 = tpu.iota {dimensions = array<i32: 1>} : vector<16x128xi32>
    %22 = vector.broadcast %20 : vector<16x1xi32> to vector<16x128xi32>
    %23 = arith.cmpi eq, %21, %22 : vector<16x128xi32>
    %24 = arith.extui %23 : vector<16x128xi1> to vector<16x128xi32>
    %25 = arith.sitofp %24 : vector<16x128xi32> to vector<16x128xf32>
    %c0_7 = arith.constant 0 : index
    %c0_8 = arith.constant 0 : index
    %26 = vector.load %arg3[%c0_7, %c0_8] : memref<128x32xf32, #tpu.memory_space<vmem>>, vector<128x32xf32>
    %cst = arith.constant dense<0.000000e+00> : vector<16x32xf32>
    %27 = tpu.matmul %25, %26, %cst {dimension_numbers = #tpu.dot_dimension_numbers<[1], [0], [0], [1], [0, 0, 1, 1], [], []>} : vector<16x128xf32>, vector<128x32xf32>, vector<16x32xf32> -> vector<16x32xf32>
    %28 = arith.addf %27, %12 : vector<16x32xf32>
    %cst_9 = arith.constant dense<0.000000e+00> : vector<16xf32>
    %29 = vector.multi_reduction <add>, %28, %cst_9 [1] : vector<16x32xf32> to vector<16xf32>
    %30 = vector.shape_cast %29 : vector<16xf32> to vector<16x1xf32>
    %cst_10 = arith.constant 3.200000e+01 : f32
    %31 = vector.broadcast %cst_10 : f32 to vector<16x1xf32>
    %32 = arith.divf %30, %31 : vector<16x1xf32>
    %33 = vector.broadcast %32 : vector<16x1xf32> to vector<16x32xf32>
    %34 = arith.subf %28, %33 : vector<16x32xf32>
    %35 = arith.mulf %34, %34 : vector<16x32xf32>
    %cst_11 = arith.constant dense<0.000000e+00> : vector<16xf32>
    %36 = vector.multi_reduction <add>, %35, %cst_11 [1] : vector<16x32xf32> to vector<16xf32>
    %37 = vector.shape_cast %36 : vector<16xf32> to vector<16x1xf32>
    %cst_12 = arith.constant 3.200000e+01 : f32
    %38 = vector.broadcast %cst_12 : f32 to vector<16x1xf32>
    %39 = arith.divf %37, %38 : vector<16x1xf32>
    %40 = vector.broadcast %32 : vector<16x1xf32> to vector<16x32xf32>
    %41 = arith.subf %28, %40 : vector<16x32xf32>
    %cst_13 = arith.constant 9.99999996E-13 : f32
    %42 = vector.broadcast %cst_13 : f32 to vector<16x1xf32>
    %43 = arith.addf %39, %42 : vector<16x1xf32>
    %44 = math.rsqrt %43 : vector<16x1xf32>
    %45 = vector.broadcast %44 : vector<16x1xf32> to vector<16x32xf32>
    %46 = arith.mulf %41, %45 : vector<16x32xf32>
    %47 = vector.broadcast %1 : vector<1x32xf32> to vector<16x32xf32>
    %48 = arith.mulf %46, %47 : vector<16x32xf32>
    %49 = vector.broadcast %2 : vector<1x32xf32> to vector<16x32xf32>
    %50 = arith.addf %48, %49 : vector<16x32xf32>
    %51 = arith.truncf %50 : vector<16x32xf32> to vector<16x32xbf16>
    %cst_14 = arith.constant dense<0.000000e+00> : vector<16x96xf32>
    %52 = tpu.matmul %51, %14, %cst_14 {dimension_numbers = #tpu.dot_dimension_numbers<[1], [0], [0], [1], [0, 0, 1, 1], [], []>} : vector<16x32xbf16>, vector<32x96xbf16>, vector<16x96xf32> -> vector<16x96xf32>
    %53 = vector.broadcast %3 : vector<1x96xf32> to vector<16x96xf32>
    %54 = arith.addf %52, %53 : vector<16x96xf32>
    %55 = vector.extract_strided_slice %54 {offsets = [0, 0], sizes = [16, 8], strides = [1, 1]} : vector<16x96xf32> to vector<16x8xf32>
    %56 = arith.truncf %55 : vector<16x8xf32> to vector<16x8xbf16>
    %57 = vector.extract_strided_slice %54 {offsets = [0, 32], sizes = [16, 8], strides = [1, 1]} : vector<16x96xf32> to vector<16x8xf32>
    %58 = arith.truncf %57 : vector<16x8xf32> to vector<16x8xbf16>
    %59 = vector.extract_strided_slice %54 {offsets = [0, 64], sizes = [16, 8], strides = [1, 1]} : vector<16x96xf32> to vector<16x8xf32>
    %60 = arith.truncf %59 : vector<16x8xf32> to vector<16x8xbf16>
    %cst_15 = arith.constant dense<0.000000e+00> : vector<16x16xf32>
    %61 = tpu.matmul %56, %58, %cst_15 {dimension_numbers = #tpu.dot_dimension_numbers<[1], [1], [0], [0], [0, 0, 1, 0], [], []>} : vector<16x8xbf16>, vector<16x8xbf16>, vector<16x16xf32> -> vector<16x16xf32>
    %cst_16 = arith.constant 0.353553385 : f32
    %62 = vector.broadcast %cst_16 : f32 to vector<16x16xf32>
    %63 = arith.mulf %61, %62 : vector<16x16xf32>
    %64 = arith.addf %63, %19 : vector<16x16xf32>
    %cst_17 = arith.constant dense<0xFF800000> : vector<16xf32>
    %65 = vector.multi_reduction <maximumf>, %64, %cst_17 [1] : vector<16x16xf32> to vector<16xf32>
    %66 = vector.shape_cast %65 : vector<16xf32> to vector<16x1xf32>
    %67 = vector.broadcast %66 : vector<16x1xf32> to vector<16x16xf32>
    %68 = arith.subf %64, %67 : vector<16x16xf32>
    %69 = math.exp %68 : vector<16x16xf32>
    %cst_18 = arith.constant dense<0.000000e+00> : vector<16xf32>
    %70 = vector.multi_reduction <add>, %69, %cst_18 [1] : vector<16x16xf32> to vector<16xf32>
    %71 = vector.shape_cast %70 : vector<16xf32> to vector<16x1xf32>
    %72 = tpu.reciprocal %71 {approx = true} : vector<16x1xf32> -> vector<16x1xf32>
    %73 = vector.broadcast %72 : vector<16x1xf32> to vector<16x16xf32>
    %74 = arith.mulf %69, %73 : vector<16x16xf32>
    %75 = arith.truncf %74 : vector<16x16xf32> to vector<16x16xbf16>
    %cst_19 = arith.constant dense<0.000000e+00> : vector<16x8xf32>
    %76 = tpu.matmul %75, %60, %cst_19 {dimension_numbers = #tpu.dot_dimension_numbers<[1], [0], [0], [1], [0, 0, 1, 1], [], []>} : vector<16x16xbf16>, vector<16x8xbf16>, vector<16x8xf32> -> vector<16x8xf32>
    %77 = vector.extract_strided_slice %54 {offsets = [0, 8], sizes = [16, 8], strides = [1, 1]} : vector<16x96xf32> to vector<16x8xf32>
    %78 = arith.truncf %77 : vector<16x8xf32> to vector<16x8xbf16>
    %79 = vector.extract_strided_slice %54 {offsets = [0, 40], sizes = [16, 8], strides = [1, 1]} : vector<16x96xf32> to vector<16x8xf32>
    %80 = arith.truncf %79 : vector<16x8xf32> to vector<16x8xbf16>
    %81 = vector.extract_strided_slice %54 {offsets = [0, 72], sizes = [16, 8], strides = [1, 1]} : vector<16x96xf32> to vector<16x8xf32>
    %82 = arith.truncf %81 : vector<16x8xf32> to vector<16x8xbf16>
    %cst_20 = arith.constant dense<0.000000e+00> : vector<16x16xf32>
    %83 = tpu.matmul %78, %80, %cst_20 {dimension_numbers = #tpu.dot_dimension_numbers<[1], [1], [0], [0], [0, 0, 1, 0], [], []>} : vector<16x8xbf16>, vector<16x8xbf16>, vector<16x16xf32> -> vector<16x16xf32>
    %cst_21 = arith.constant 0.353553385 : f32
    %84 = vector.broadcast %cst_21 : f32 to vector<16x16xf32>
    %85 = arith.mulf %83, %84 : vector<16x16xf32>
    %86 = arith.addf %85, %19 : vector<16x16xf32>
    %cst_22 = arith.constant dense<0xFF800000> : vector<16xf32>
    %87 = vector.multi_reduction <maximumf>, %86, %cst_22 [1] : vector<16x16xf32> to vector<16xf32>
    %88 = vector.shape_cast %87 : vector<16xf32> to vector<16x1xf32>
    %89 = vector.broadcast %88 : vector<16x1xf32> to vector<16x16xf32>
    %90 = arith.subf %86, %89 : vector<16x16xf32>
    %91 = math.exp %90 : vector<16x16xf32>
    %cst_23 = arith.constant dense<0.000000e+00> : vector<16xf32>
    %92 = vector.multi_reduction <add>, %91, %cst_23 [1] : vector<16x16xf32> to vector<16xf32>
    %93 = vector.shape_cast %92 : vector<16xf32> to vector<16x1xf32>
    %94 = tpu.reciprocal %93 {approx = true} : vector<16x1xf32> -> vector<16x1xf32>
    %95 = vector.broadcast %94 : vector<16x1xf32> to vector<16x16xf32>
    %96 = arith.mulf %91, %95 : vector<16x16xf32>
    %97 = arith.truncf %96 : vector<16x16xf32> to vector<16x16xbf16>
    %cst_24 = arith.constant dense<0.000000e+00> : vector<16x8xf32>
    %98 = tpu.matmul %97, %82, %cst_24 {dimension_numbers = #tpu.dot_dimension_numbers<[1], [0], [0], [1], [0, 0, 1, 1], [], []>} : vector<16x16xbf16>, vector<16x8xbf16>, vector<16x8xf32> -> vector<16x8xf32>
    %99 = vector.extract_strided_slice %54 {offsets = [0, 16], sizes = [16, 8], strides = [1, 1]} : vector<16x96xf32> to vector<16x8xf32>
    %100 = arith.truncf %99 : vector<16x8xf32> to vector<16x8xbf16>
    %101 = vector.extract_strided_slice %54 {offsets = [0, 48], sizes = [16, 8], strides = [1, 1]} : vector<16x96xf32> to vector<16x8xf32>
    %102 = arith.truncf %101 : vector<16x8xf32> to vector<16x8xbf16>
    %103 = vector.extract_strided_slice %54 {offsets = [0, 80], sizes = [16, 8], strides = [1, 1]} : vector<16x96xf32> to vector<16x8xf32>
    %104 = arith.truncf %103 : vector<16x8xf32> to vector<16x8xbf16>
    %cst_25 = arith.constant dense<0.000000e+00> : vector<16x16xf32>
    %105 = tpu.matmul %100, %102, %cst_25 {dimension_numbers = #tpu.dot_dimension_numbers<[1], [1], [0], [0], [0, 0, 1, 0], [], []>} : vector<16x8xbf16>, vector<16x8xbf16>, vector<16x16xf32> -> vector<16x16xf32>
    %cst_26 = arith.constant 0.353553385 : f32
    %106 = vector.broadcast %cst_26 : f32 to vector<16x16xf32>
    %107 = arith.mulf %105, %106 : vector<16x16xf32>
    %108 = arith.addf %107, %19 : vector<16x16xf32>
    %cst_27 = arith.constant dense<0xFF800000> : vector<16xf32>
    %109 = vector.multi_reduction <maximumf>, %108, %cst_27 [1] : vector<16x16xf32> to vector<16xf32>
    %110 = vector.shape_cast %109 : vector<16xf32> to vector<16x1xf32>
    %111 = vector.broadcast %110 : vector<16x1xf32> to vector<16x16xf32>
    %112 = arith.subf %108, %111 : vector<16x16xf32>
    %113 = math.exp %112 : vector<16x16xf32>
    %cst_28 = arith.constant dense<0.000000e+00> : vector<16xf32>
    %114 = vector.multi_reduction <add>, %113, %cst_28 [1] : vector<16x16xf32> to vector<16xf32>
    %115 = vector.shape_cast %114 : vector<16xf32> to vector<16x1xf32>
    %116 = tpu.reciprocal %115 {approx = true} : vector<16x1xf32> -> vector<16x1xf32>
    %117 = vector.broadcast %116 : vector<16x1xf32> to vector<16x16xf32>
    %118 = arith.mulf %113, %117 : vector<16x16xf32>
    %119 = arith.truncf %118 : vector<16x16xf32> to vector<16x16xbf16>
    %cst_29 = arith.constant dense<0.000000e+00> : vector<16x8xf32>
    %120 = tpu.matmul %119, %104, %cst_29 {dimension_numbers = #tpu.dot_dimension_numbers<[1], [0], [0], [1], [0, 0, 1, 1], [], []>} : vector<16x16xbf16>, vector<16x8xbf16>, vector<16x8xf32> -> vector<16x8xf32>
    %121 = vector.extract_strided_slice %54 {offsets = [0, 24], sizes = [16, 8], strides = [1, 1]} : vector<16x96xf32> to vector<16x8xf32>
    %122 = arith.truncf %121 : vector<16x8xf32> to vector<16x8xbf16>
    %123 = vector.extract_strided_slice %54 {offsets = [0, 56], sizes = [16, 8], strides = [1, 1]} : vector<16x96xf32> to vector<16x8xf32>
    %124 = arith.truncf %123 : vector<16x8xf32> to vector<16x8xbf16>
    %125 = vector.extract_strided_slice %54 {offsets = [0, 88], sizes = [16, 8], strides = [1, 1]} : vector<16x96xf32> to vector<16x8xf32>
    %126 = arith.truncf %125 : vector<16x8xf32> to vector<16x8xbf16>
    %cst_30 = arith.constant dense<0.000000e+00> : vector<16x16xf32>
    %127 = tpu.matmul %122, %124, %cst_30 {dimension_numbers = #tpu.dot_dimension_numbers<[1], [1], [0], [0], [0, 0, 1, 0], [], []>} : vector<16x8xbf16>, vector<16x8xbf16>, vector<16x16xf32> -> vector<16x16xf32>
    %cst_31 = arith.constant 0.353553385 : f32
    %128 = vector.broadcast %cst_31 : f32 to vector<16x16xf32>
    %129 = arith.mulf %127, %128 : vector<16x16xf32>
    %130 = arith.addf %129, %19 : vector<16x16xf32>
    %cst_32 = arith.constant dense<0xFF800000> : vector<16xf32>
    %131 = vector.multi_reduction <maximumf>, %130, %cst_32 [1] : vector<16x16xf32> to vector<16xf32>
    %132 = vector.shape_cast %131 : vector<16xf32> to vector<16x1xf32>
    %133 = vector.broadcast %132 : vector<16x1xf32> to vector<16x16xf32>
    %134 = arith.subf %130, %133 : vector<16x16xf32>
    %135 = math.exp %134 : vector<16x16xf32>
    %cst_33 = arith.constant dense<0.000000e+00> : vector<16xf32>
    %136 = vector.multi_reduction <add>, %135, %cst_33 [1] : vector<16x16xf32> to vector<16xf32>
    %137 = vector.shape_cast %136 : vector<16xf32> to vector<16x1xf32>
    %138 = tpu.reciprocal %137 {approx = true} : vector<16x1xf32> -> vector<16x1xf32>
    %139 = vector.broadcast %138 : vector<16x1xf32> to vector<16x16xf32>
    %140 = arith.mulf %135, %139 : vector<16x16xf32>
    %141 = arith.truncf %140 : vector<16x16xf32> to vector<16x16xbf16>
    %cst_34 = arith.constant dense<0.000000e+00> : vector<16x8xf32>
    %142 = tpu.matmul %141, %126, %cst_34 {dimension_numbers = #tpu.dot_dimension_numbers<[1], [0], [0], [1], [0, 0, 1, 1], [], []>} : vector<16x16xbf16>, vector<16x8xbf16>, vector<16x8xf32> -> vector<16x8xf32>
    %143 = tpu.concatenate %76, %98, %120, %142 in 1 : vector<16x8xf32>, vector<16x8xf32>, vector<16x8xf32>, vector<16x8xf32> -> vector<16x32xf32>
    %144 = arith.truncf %143 : vector<16x32xf32> to vector<16x32xbf16>
    %cst_35 = arith.constant dense<0.000000e+00> : vector<16x32xf32>
    %145 = tpu.matmul %144, %15, %cst_35 {dimension_numbers = #tpu.dot_dimension_numbers<[1], [0], [0], [1], [0, 0, 1, 1], [], []>} : vector<16x32xbf16>, vector<32x32xbf16>, vector<16x32xf32> -> vector<16x32xf32>
    %146 = vector.broadcast %4 : vector<1x32xf32> to vector<16x32xf32>
    %147 = arith.addf %145, %146 : vector<16x32xf32>
    %148 = arith.addf %50, %147 : vector<16x32xf32>
    %cst_36 = arith.constant dense<0.000000e+00> : vector<16xf32>
    %149 = vector.multi_reduction <add>, %148, %cst_36 [1] : vector<16x32xf32> to vector<16xf32>
    %150 = vector.shape_cast %149 : vector<16xf32> to vector<16x1xf32>
    %cst_37 = arith.constant 3.200000e+01 : f32
    %151 = vector.broadcast %cst_37 : f32 to vector<16x1xf32>
    %152 = arith.divf %150, %151 : vector<16x1xf32>
    %153 = vector.broadcast %152 : vector<16x1xf32> to vector<16x32xf32>
    %154 = arith.subf %148, %153 : vector<16x32xf32>
    %155 = arith.mulf %154, %154 : vector<16x32xf32>
    %cst_38 = arith.constant dense<0.000000e+00> : vector<16xf32>
    %156 = vector.multi_reduction <add>, %155, %cst_38 [1] : vector<16x32xf32> to vector<16xf32>
    %157 = vector.shape_cast %156 : vector<16xf32> to vector<16x1xf32>
    %cst_39 = arith.constant 3.200000e+01 : f32
    %158 = vector.broadcast %cst_39 : f32 to vector<16x1xf32>
    %159 = arith.divf %157, %158 : vector<16x1xf32>
    %160 = vector.broadcast %152 : vector<16x1xf32> to vector<16x32xf32>
    %161 = arith.subf %148, %160 : vector<16x32xf32>
    %cst_40 = arith.constant 9.99999996E-13 : f32
    %162 = vector.broadcast %cst_40 : f32 to vector<16x1xf32>
    %163 = arith.addf %159, %162 : vector<16x1xf32>
    %164 = math.rsqrt %163 : vector<16x1xf32>
    %165 = vector.broadcast %164 : vector<16x1xf32> to vector<16x32xf32>
    %166 = arith.mulf %161, %165 : vector<16x32xf32>
    %167 = vector.broadcast %5 : vector<1x32xf32> to vector<16x32xf32>
    %168 = arith.mulf %166, %167 : vector<16x32xf32>
    %169 = vector.broadcast %6 : vector<1x32xf32> to vector<16x32xf32>
    %170 = arith.addf %168, %169 : vector<16x32xf32>
    %171 = arith.truncf %170 : vector<16x32xf32> to vector<16x32xbf16>
    %cst_41 = arith.constant dense<0.000000e+00> : vector<16x64xf32>
    %172 = tpu.matmul %171, %16, %cst_41 {dimension_numbers = #tpu.dot_dimension_numbers<[1], [0], [0], [1], [0, 0, 1, 1], [], []>} : vector<16x32xbf16>, vector<32x64xbf16>, vector<16x64xf32> -> vector<16x64xf32>
    %173 = vector.broadcast %7 : vector<1x64xf32> to vector<16x64xf32>
    %174 = arith.addf %172, %173 : vector<16x64xf32>
    %175 = arith.mulf %174, %174 : vector<16x64xf32>
    %176 = arith.mulf %174, %175 : vector<16x64xf32>
    %cst_42 = arith.constant 4.471500e-02 : f32
    %177 = vector.broadcast %cst_42 : f32 to vector<16x64xf32>
    %178 = arith.mulf %177, %176 : vector<16x64xf32>
    %179 = arith.addf %174, %178 : vector<16x64xf32>
    %cst_43 = arith.constant 0.797884583 : f32
    %180 = vector.broadcast %cst_43 : f32 to vector<16x64xf32>
    %181 = arith.mulf %180, %179 : vector<16x64xf32>
    %182 = math.tanh %181 : vector<16x64xf32>
    %cst_44 = arith.constant 1.000000e+00 : f32
    %183 = vector.broadcast %cst_44 : f32 to vector<16x64xf32>
    %184 = arith.addf %183, %182 : vector<16x64xf32>
    %cst_45 = arith.constant 5.000000e-01 : f32
    %185 = vector.broadcast %cst_45 : f32 to vector<16x64xf32>
    %186 = arith.mulf %185, %184 : vector<16x64xf32>
    %187 = arith.mulf %174, %186 : vector<16x64xf32>
    %188 = arith.truncf %187 : vector<16x64xf32> to vector<16x64xbf16>
    %cst_46 = arith.constant dense<0.000000e+00> : vector<16x32xf32>
    %189 = tpu.matmul %188, %17, %cst_46 {dimension_numbers = #tpu.dot_dimension_numbers<[1], [1], [0], [0], [0, 0, 1, 0], [], []>} : vector<16x64xbf16>, vector<32x64xbf16>, vector<16x32xf32> -> vector<16x32xf32>
    %190 = vector.broadcast %8 : vector<1x32xf32> to vector<16x32xf32>
    %191 = arith.addf %189, %190 : vector<16x32xf32>
    %192 = arith.addf %170, %191 : vector<16x32xf32>
    %cst_47 = arith.constant dense<0.000000e+00> : vector<16xf32>
    %193 = vector.multi_reduction <add>, %192, %cst_47 [1] : vector<16x32xf32> to vector<16xf32>
    %194 = vector.shape_cast %193 : vector<16xf32> to vector<16x1xf32>
    %cst_48 = arith.constant 3.200000e+01 : f32
    %195 = vector.broadcast %cst_48 : f32 to vector<16x1xf32>
    %196 = arith.divf %194, %195 : vector<16x1xf32>
    %197 = vector.broadcast %196 : vector<16x1xf32> to vector<16x32xf32>
    %198 = arith.subf %192, %197 : vector<16x32xf32>
    %199 = arith.mulf %198, %198 : vector<16x32xf32>
    %cst_49 = arith.constant dense<0.000000e+00> : vector<16xf32>
    %200 = vector.multi_reduction <add>, %199, %cst_49 [1] : vector<16x32xf32> to vector<16xf32>
    %201 = vector.shape_cast %200 : vector<16xf32> to vector<16x1xf32>
    %cst_50 = arith.constant 3.200000e+01 : f32
    %202 = vector.broadcast %cst_50 : f32 to vector<16x1xf32>
    %203 = arith.divf %201, %202 : vector<16x1xf32>
    %204 = vector.broadcast %196 : vector<16x1xf32> to vector<16x32xf32>
    %205 = arith.subf %192, %204 : vector<16x32xf32>
    %cst_51 = arith.constant 9.99999996E-13 : f32
    %206 = vector.broadcast %cst_51 : f32 to vector<16x1xf32>
    %207 = arith.addf %203, %206 : vector<16x1xf32>
    %208 = math.rsqrt %207 : vector<16x1xf32>
    %209 = vector.broadcast %208 : vector<16x1xf32> to vector<16x32xf32>
    %210 = arith.mulf %205, %209 : vector<16x32xf32>
    %211 = vector.broadcast %9 : vector<1x32xf32> to vector<16x32xf32>
    %212 = arith.mulf %210, %211 : vector<16x32xf32>
    %213 = vector.broadcast %10 : vector<1x32xf32> to vector<16x32xf32>
    %214 = arith.addf %212, %213 : vector<16x32xf32>
    %c0_52 = arith.constant 0 : index
    %c0_53 = arith.constant 0 : index
    %c0_54 = arith.constant 0 : index
    %215 = vector.load %arg6[%c0_52, %c0_53, %c0_54] : memref<2x16x32xf32, #tpu.memory_space<vmem>>, vector<1x16x32xf32>
    %216 = vector.shape_cast %215 : vector<1x16x32xf32> to vector<16x32xf32>
    %217 = vector.shape_cast %214 : vector<16x32xf32> to vector<1x16x32xf32>
    tpu.vector_store %arg6[%c0_52, %c0_53, %c0_54], %217 {strides = array<i32>} : memref<2x16x32xf32, #tpu.memory_space<vmem>>, vector<1x16x32xf32>,
    %218 = arith.truncf %214 : vector<16x32xf32> to vector<16x32xbf16>
    %cst_55 = arith.constant dense<0.000000e+00> : vector<16x96xf32>
    %219 = tpu.matmul %218, %14, %cst_55 {dimension_numbers = #tpu.dot_dimension_numbers<[1], [0], [0], [1], [0, 0, 1, 1], [], []>} : vector<16x32xbf16>, vector<32x96xbf16>, vector<16x96xf32> -> vector<16x96xf32>
    %220 = vector.broadcast %3 : vector<1x96xf32> to vector<16x96xf32>
    %221 = arith.addf %219, %220 : vector<16x96xf32>
    %222 = vector.extract_strided_slice %221 {offsets = [0, 0], sizes = [16, 8], strides = [1, 1]} : vector<16x96xf32> to vector<16x8xf32>
    %223 = arith.truncf %222 : vector<16x8xf32> to vector<16x8xbf16>
    %224 = vector.extract_strided_slice %221 {offsets = [0, 32], sizes = [16, 8], strides = [1, 1]} : vector<16x96xf32> to vector<16x8xf32>
    %225 = arith.truncf %224 : vector<16x8xf32> to vector<16x8xbf16>
    %226 = vector.extract_strided_slice %221 {offsets = [0, 64], sizes = [16, 8], strides = [1, 1]} : vector<16x96xf32> to vector<16x8xf32>
    %227 = arith.truncf %226 : vector<16x8xf32> to vector<16x8xbf16>
    %cst_56 = arith.constant dense<0.000000e+00> : vector<16x16xf32>
    %228 = tpu.matmul %223, %225, %cst_56 {dimension_numbers = #tpu.dot_dimension_numbers<[1], [1], [0], [0], [0, 0, 1, 0], [], []>} : vector<16x8xbf16>, vector<16x8xbf16>, vector<16x16xf32> -> vector<16x16xf32>
    %cst_57 = arith.constant 0.353553385 : f32
    %229 = vector.broadcast %cst_57 : f32 to vector<16x16xf32>
    %230 = arith.mulf %228, %229 : vector<16x16xf32>
    %231 = arith.addf %230, %19 : vector<16x16xf32>
    %cst_58 = arith.constant dense<0xFF800000> : vector<16xf32>
    %232 = vector.multi_reduction <maximumf>, %231, %cst_58 [1] : vector<16x16xf32> to vector<16xf32>
    %233 = vector.shape_cast %232 : vector<16xf32> to vector<16x1xf32>
    %234 = vector.broadcast %233 : vector<16x1xf32> to vector<16x16xf32>
    %235 = arith.subf %231, %234 : vector<16x16xf32>
    %236 = math.exp %235 : vector<16x16xf32>
    %cst_59 = arith.constant dense<0.000000e+00> : vector<16xf32>
    %237 = vector.multi_reduction <add>, %236, %cst_59 [1] : vector<16x16xf32> to vector<16xf32>
    %238 = vector.shape_cast %237 : vector<16xf32> to vector<16x1xf32>
    %239 = tpu.reciprocal %238 {approx = true} : vector<16x1xf32> -> vector<16x1xf32>
    %240 = vector.broadcast %239 : vector<16x1xf32> to vector<16x16xf32>
    %241 = arith.mulf %236, %240 : vector<16x16xf32>
    %242 = arith.truncf %241 : vector<16x16xf32> to vector<16x16xbf16>
    %cst_60 = arith.constant dense<0.000000e+00> : vector<16x8xf32>
    %243 = tpu.matmul %242, %227, %cst_60 {dimension_numbers = #tpu.dot_dimension_numbers<[1], [0], [0], [1], [0, 0, 1, 1], [], []>} : vector<16x16xbf16>, vector<16x8xbf16>, vector<16x8xf32> -> vector<16x8xf32>
    %244 = vector.extract_strided_slice %221 {offsets = [0, 8], sizes = [16, 8], strides = [1, 1]} : vector<16x96xf32> to vector<16x8xf32>
    %245 = arith.truncf %244 : vector<16x8xf32> to vector<16x8xbf16>
    %246 = vector.extract_strided_slice %221 {offsets = [0, 40], sizes = [16, 8], strides = [1, 1]} : vector<16x96xf32> to vector<16x8xf32>
    %247 = arith.truncf %246 : vector<16x8xf32> to vector<16x8xbf16>
    %248 = vector.extract_strided_slice %221 {offsets = [0, 72], sizes = [16, 8], strides = [1, 1]} : vector<16x96xf32> to vector<16x8xf32>
    %249 = arith.truncf %248 : vector<16x8xf32> to vector<16x8xbf16>
    %cst_61 = arith.constant dense<0.000000e+00> : vector<16x16xf32>
    %250 = tpu.matmul %245, %247, %cst_61 {dimension_numbers = #tpu.dot_dimension_numbers<[1], [1], [0], [0], [0, 0, 1, 0], [], []>} : vector<16x8xbf16>, vector<16x8xbf16>, vector<16x16xf32> -> vector<16x16xf32>
    %cst_62 = arith.constant 0.353553385 : f32
    %251 = vector.broadcast %cst_62 : f32 to vector<16x16xf32>
    %252 = arith.mulf %250, %251 : vector<16x16xf32>
    %253 = arith.addf %252, %19 : vector<16x16xf32>
    %cst_63 = arith.constant dense<0xFF800000> : vector<16xf32>
    %254 = vector.multi_reduction <maximumf>, %253, %cst_63 [1] : vector<16x16xf32> to vector<16xf32>
    %255 = vector.shape_cast %254 : vector<16xf32> to vector<16x1xf32>
    %256 = vector.broadcast %255 : vector<16x1xf32> to vector<16x16xf32>
    %257 = arith.subf %253, %256 : vector<16x16xf32>
    %258 = math.exp %257 : vector<16x16xf32>
    %cst_64 = arith.constant dense<0.000000e+00> : vector<16xf32>
    %259 = vector.multi_reduction <add>, %258, %cst_64 [1] : vector<16x16xf32> to vector<16xf32>
    %260 = vector.shape_cast %259 : vector<16xf32> to vector<16x1xf32>
    %261 = tpu.reciprocal %260 {approx = true} : vector<16x1xf32> -> vector<16x1xf32>
    %262 = vector.broadcast %261 : vector<16x1xf32> to vector<16x16xf32>
    %263 = arith.mulf %258, %262 : vector<16x16xf32>
    %264 = arith.truncf %263 : vector<16x16xf32> to vector<16x16xbf16>
    %cst_65 = arith.constant dense<0.000000e+00> : vector<16x8xf32>
    %265 = tpu.matmul %264, %249, %cst_65 {dimension_numbers = #tpu.dot_dimension_numbers<[1], [0], [0], [1], [0, 0, 1, 1], [], []>} : vector<16x16xbf16>, vector<16x8xbf16>, vector<16x8xf32> -> vector<16x8xf32>
    %266 = vector.extract_strided_slice %221 {offsets = [0, 16], sizes = [16, 8], strides = [1, 1]} : vector<16x96xf32> to vector<16x8xf32>
    %267 = arith.truncf %266 : vector<16x8xf32> to vector<16x8xbf16>
    %268 = vector.extract_strided_slice %221 {offsets = [0, 48], sizes = [16, 8], strides = [1, 1]} : vector<16x96xf32> to vector<16x8xf32>
    %269 = arith.truncf %268 : vector<16x8xf32> to vector<16x8xbf16>
    %270 = vector.extract_strided_slice %221 {offsets = [0, 80], sizes = [16, 8], strides = [1, 1]} : vector<16x96xf32> to vector<16x8xf32>
    %271 = arith.truncf %270 : vector<16x8xf32> to vector<16x8xbf16>
    %cst_66 = arith.constant dense<0.000000e+00> : vector<16x16xf32>
    %272 = tpu.matmul %267, %269, %cst_66 {dimension_numbers = #tpu.dot_dimension_numbers<[1], [1], [0], [0], [0, 0, 1, 0], [], []>} : vector<16x8xbf16>, vector<16x8xbf16>, vector<16x16xf32> -> vector<16x16xf32>
    %cst_67 = arith.constant 0.353553385 : f32
    %273 = vector.broadcast %cst_67 : f32 to vector<16x16xf32>
    %274 = arith.mulf %272, %273 : vector<16x16xf32>
    %275 = arith.addf %274, %19 : vector<16x16xf32>
    %cst_68 = arith.constant dense<0xFF800000> : vector<16xf32>
    %276 = vector.multi_reduction <maximumf>, %275, %cst_68 [1] : vector<16x16xf32> to vector<16xf32>
    %277 = vector.shape_cast %276 : vector<16xf32> to vector<16x1xf32>
    %278 = vector.broadcast %277 : vector<16x1xf32> to vector<16x16xf32>
    %279 = arith.subf %275, %278 : vector<16x16xf32>
    %280 = math.exp %279 : vector<16x16xf32>
    %cst_69 = arith.constant dense<0.000000e+00> : vector<16xf32>
    %281 = vector.multi_reduction <add>, %280, %cst_69 [1] : vector<16x16xf32> to vector<16xf32>
    %282 = vector.shape_cast %281 : vector<16xf32> to vector<16x1xf32>
    %283 = tpu.reciprocal %282 {approx = true} : vector<16x1xf32> -> vector<16x1xf32>
    %284 = vector.broadcast %283 : vector<16x1xf32> to vector<16x16xf32>
    %285 = arith.mulf %280, %284 : vector<16x16xf32>
    %286 = arith.truncf %285 : vector<16x16xf32> to vector<16x16xbf16>
    %cst_70 = arith.constant dense<0.000000e+00> : vector<16x8xf32>
    %287 = tpu.matmul %286, %271, %cst_70 {dimension_numbers = #tpu.dot_dimension_numbers<[1], [0], [0], [1], [0, 0, 1, 1], [], []>} : vector<16x16xbf16>, vector<16x8xbf16>, vector<16x8xf32> -> vector<16x8xf32>
    %288 = vector.extract_strided_slice %221 {offsets = [0, 24], sizes = [16, 8], strides = [1, 1]} : vector<16x96xf32> to vector<16x8xf32>
    %289 = arith.truncf %288 : vector<16x8xf32> to vector<16x8xbf16>
    %290 = vector.extract_strided_slice %221 {offsets = [0, 56], sizes = [16, 8], strides = [1, 1]} : vector<16x96xf32> to vector<16x8xf32>
    %291 = arith.truncf %290 : vector<16x8xf32> to vector<16x8xbf16>
    %292 = vector.extract_strided_slice %221 {offsets = [0, 88], sizes = [16, 8], strides = [1, 1]} : vector<16x96xf32> to vector<16x8xf32>
    %293 = arith.truncf %292 : vector<16x8xf32> to vector<16x8xbf16>
    %cst_71 = arith.constant dense<0.000000e+00> : vector<16x16xf32>
    %294 = tpu.matmul %289, %291, %cst_71 {dimension_numbers = #tpu.dot_dimension_numbers<[1], [1], [0], [0], [0, 0, 1, 0], [], []>} : vector<16x8xbf16>, vector<16x8xbf16>, vector<16x16xf32> -> vector<16x16xf32>
    %cst_72 = arith.constant 0.353553385 : f32
    %295 = vector.broadcast %cst_72 : f32 to vector<16x16xf32>
    %296 = arith.mulf %294, %295 : vector<16x16xf32>
    %297 = arith.addf %296, %19 : vector<16x16xf32>
    %cst_73 = arith.constant dense<0xFF800000> : vector<16xf32>
    %298 = vector.multi_reduction <maximumf>, %297, %cst_73 [1] : vector<16x16xf32> to vector<16xf32>
    %299 = vector.shape_cast %298 : vector<16xf32> to vector<16x1xf32>
    %300 = vector.broadcast %299 : vector<16x1xf32> to vector<16x16xf32>
    %301 = arith.subf %297, %300 : vector<16x16xf32>
    %302 = math.exp %301 : vector<16x16xf32>
    %cst_74 = arith.constant dense<0.000000e+00> : vector<16xf32>
    %303 = vector.multi_reduction <add>, %302, %cst_74 [1] : vector<16x16xf32> to vector<16xf32>
    %304 = vector.shape_cast %303 : vector<16xf32> to vector<16x1xf32>
    %305 = tpu.reciprocal %304 {approx = true} : vector<16x1xf32> -> vector<16x1xf32>
    %306 = vector.broadcast %305 : vector<16x1xf32> to vector<16x16xf32>
    %307 = arith.mulf %302, %306 : vector<16x16xf32>
    %308 = arith.truncf %307 : vector<16x16xf32> to vector<16x16xbf16>
    %cst_75 = arith.constant dense<0.000000e+00> : vector<16x8xf32>
    %309 = tpu.matmul %308, %293, %cst_75 {dimension_numbers = #tpu.dot_dimension_numbers<[1], [0], [0], [1], [0, 0, 1, 1], [], []>} : vector<16x16xbf16>, vector<16x8xbf16>, vector<16x8xf32> -> vector<16x8xf32>
    %310 = tpu.concatenate %243, %265, %287, %309 in 1 : vector<16x8xf32>, vector<16x8xf32>, vector<16x8xf32>, vector<16x8xf32> -> vector<16x32xf32>
    %311 = arith.truncf %310 : vector<16x32xf32> to vector<16x32xbf16>
    %cst_76 = arith.constant dense<0.000000e+00> : vector<16x32xf32>
    %312 = tpu.matmul %311, %15, %cst_76 {dimension_numbers = #tpu.dot_dimension_numbers<[1], [0], [0], [1], [0, 0, 1, 1], [], []>} : vector<16x32xbf16>, vector<32x32xbf16>, vector<16x32xf32> -> vector<16x32xf32>
    %313 = vector.broadcast %4 : vector<1x32xf32> to vector<16x32xf32>
    %314 = arith.addf %312, %313 : vector<16x32xf32>
    %315 = arith.addf %214, %314 : vector<16x32xf32>
    %cst_77 = arith.constant dense<0.000000e+00> : vector<16xf32>
    %316 = vector.multi_reduction <add>, %315, %cst_77 [1] : vector<16x32xf32> to vector<16xf32>
    %317 = vector.shape_cast %316 : vector<16xf32> to vector<16x1xf32>
    %cst_78 = arith.constant 3.200000e+01 : f32
    %318 = vector.broadcast %cst_78 : f32 to vector<16x1xf32>
    %319 = arith.divf %317, %318 : vector<16x1xf32>
    %320 = vector.broadcast %319 : vector<16x1xf32> to vector<16x32xf32>
    %321 = arith.subf %315, %320 : vector<16x32xf32>
    %322 = arith.mulf %321, %321 : vector<16x32xf32>
    %cst_79 = arith.constant dense<0.000000e+00> : vector<16xf32>
    %323 = vector.multi_reduction <add>, %322, %cst_79 [1] : vector<16x32xf32> to vector<16xf32>
    %324 = vector.shape_cast %323 : vector<16xf32> to vector<16x1xf32>
    %cst_80 = arith.constant 3.200000e+01 : f32
    %325 = vector.broadcast %cst_80 : f32 to vector<16x1xf32>
    %326 = arith.divf %324, %325 : vector<16x1xf32>
    %327 = vector.broadcast %319 : vector<16x1xf32> to vector<16x32xf32>
    %328 = arith.subf %315, %327 : vector<16x32xf32>
    %cst_81 = arith.constant 9.99999996E-13 : f32
    %329 = vector.broadcast %cst_81 : f32 to vector<16x1xf32>
    %330 = arith.addf %326, %329 : vector<16x1xf32>
    %331 = math.rsqrt %330 : vector<16x1xf32>
    %332 = vector.broadcast %331 : vector<16x1xf32> to vector<16x32xf32>
    %333 = arith.mulf %328, %332 : vector<16x32xf32>
    %334 = vector.broadcast %5 : vector<1x32xf32> to vector<16x32xf32>
    %335 = arith.mulf %333, %334 : vector<16x32xf32>
    %336 = vector.broadcast %6 : vector<1x32xf32> to vector<16x32xf32>
    %337 = arith.addf %335, %336 : vector<16x32xf32>
    %338 = arith.truncf %337 : vector<16x32xf32> to vector<16x32xbf16>
    %cst_82 = arith.constant dense<0.000000e+00> : vector<16x64xf32>
    %339 = tpu.matmul %338, %16, %cst_82 {dimension_numbers = #tpu.dot_dimension_numbers<[1], [0], [0], [1], [0, 0, 1, 1], [], []>} : vector<16x32xbf16>, vector<32x64xbf16>, vector<16x64xf32> -> vector<16x64xf32>
    %340 = vector.broadcast %7 : vector<1x64xf32> to vector<16x64xf32>
    %341 = arith.addf %339, %340 : vector<16x64xf32>
    %342 = arith.mulf %341, %341 : vector<16x64xf32>
    %343 = arith.mulf %341, %342 : vector<16x64xf32>
    %cst_83 = arith.constant 4.471500e-02 : f32
    %344 = vector.broadcast %cst_83 : f32 to vector<16x64xf32>
    %345 = arith.mulf %344, %343 : vector<16x64xf32>
    %346 = arith.addf %341, %345 : vector<16x64xf32>
    %cst_84 = arith.constant 0.797884583 : f32
    %347 = vector.broadcast %cst_84 : f32 to vector<16x64xf32>
    %348 = arith.mulf %347, %346 : vector<16x64xf32>
    %349 = math.tanh %348 : vector<16x64xf32>
    %cst_85 = arith.constant 1.000000e+00 : f32
    %350 = vector.broadcast %cst_85 : f32 to vector<16x64xf32>
    %351 = arith.addf %350, %349 : vector<16x64xf32>
    %cst_86 = arith.constant 5.000000e-01 : f32
    %352 = vector.broadcast %cst_86 : f32 to vector<16x64xf32>
    %353 = arith.mulf %352, %351 : vector<16x64xf32>
    %354 = arith.mulf %341, %353 : vector<16x64xf32>
    %355 = arith.truncf %354 : vector<16x64xf32> to vector<16x64xbf16>
    %cst_87 = arith.constant dense<0.000000e+00> : vector<16x32xf32>
    %356 = tpu.matmul %355, %17, %cst_87 {dimension_numbers = #tpu.dot_dimension_numbers<[1], [1], [0], [0], [0, 0, 1, 0], [], []>} : vector<16x64xbf16>, vector<32x64xbf16>, vector<16x32xf32> -> vector<16x32xf32>
    %357 = vector.broadcast %8 : vector<1x32xf32> to vector<16x32xf32>
    %358 = arith.addf %356, %357 : vector<16x32xf32>
    %359 = arith.addf %337, %358 : vector<16x32xf32>
    %cst_88 = arith.constant dense<0.000000e+00> : vector<16xf32>
    %360 = vector.multi_reduction <add>, %359, %cst_88 [1] : vector<16x32xf32> to vector<16xf32>
    %361 = vector.shape_cast %360 : vector<16xf32> to vector<16x1xf32>
    %cst_89 = arith.constant 3.200000e+01 : f32
    %362 = vector.broadcast %cst_89 : f32 to vector<16x1xf32>
    %363 = arith.divf %361, %362 : vector<16x1xf32>
    %364 = vector.broadcast %363 : vector<16x1xf32> to vector<16x32xf32>
    %365 = arith.subf %359, %364 : vector<16x32xf32>
    %366 = arith.mulf %365, %365 : vector<16x32xf32>
    %cst_90 = arith.constant dense<0.000000e+00> : vector<16xf32>
    %367 = vector.multi_reduction <add>, %366, %cst_90 [1] : vector<16x32xf32> to vector<16xf32>
    %368 = vector.shape_cast %367 : vector<16xf32> to vector<16x1xf32>
    %cst_91 = arith.constant 3.200000e+01 : f32
    %369 = vector.broadcast %cst_91 : f32 to vector<16x1xf32>
    %370 = arith.divf %368, %369 : vector<16x1xf32>
    %371 = vector.broadcast %363 : vector<16x1xf32> to vector<16x32xf32>
    %372 = arith.subf %359, %371 : vector<16x32xf32>
    %cst_92 = arith.constant 9.99999996E-13 : f32
    %373 = vector.broadcast %cst_92 : f32 to vector<16x1xf32>
    %374 = arith.addf %370, %373 : vector<16x1xf32>
    %375 = math.rsqrt %374 : vector<16x1xf32>
    %376 = vector.broadcast %375 : vector<16x1xf32> to vector<16x32xf32>
    %377 = arith.mulf %372, %376 : vector<16x32xf32>
    %378 = vector.broadcast %9 : vector<1x32xf32> to vector<16x32xf32>
    %379 = arith.mulf %377, %378 : vector<16x32xf32>
    %380 = vector.broadcast %10 : vector<1x32xf32> to vector<16x32xf32>
    %381 = arith.addf %379, %380 : vector<16x32xf32>
    %c1 = arith.constant 1 : index
    %c0_93 = arith.constant 0 : index
    %c0_94 = arith.constant 0 : index
    %382 = vector.load %arg6[%c1, %c0_93, %c0_94] : memref<2x16x32xf32, #tpu.memory_space<vmem>>, vector<1x16x32xf32>
    %383 = vector.shape_cast %382 : vector<1x16x32xf32> to vector<16x32xf32>
    %384 = vector.shape_cast %381 : vector<16x32xf32> to vector<1x16x32xf32>
    tpu.vector_store %arg6[%c1, %c0_93, %c0_94], %384 {strides = array<i32>} : memref<2x16x32xf32, #tpu.memory_space<vmem>>, vector<1x16x32xf32>,
    %385 = arith.truncf %381 : vector<16x32xf32> to vector<16x32xbf16>
    %cst_95 = arith.constant dense<0.000000e+00> : vector<16x128xf32>
    %386 = tpu.matmul %385, %18, %cst_95 {dimension_numbers = #tpu.dot_dimension_numbers<[1], [0], [0], [1], [0, 0, 1, 1], [], []>} : vector<16x32xbf16>, vector<32x128xbf16>, vector<16x128xf32> -> vector<16x128xf32>
    %387 = vector.broadcast %11 : vector<1x128xf32> to vector<16x128xf32>
    %388 = arith.addf %386, %387 : vector<16x128xf32>
    %c0_96 = arith.constant 0 : index
    %c0_97 = arith.constant 0 : index
    %389 = vector.load %arg7[%c0_96, %c0_97] : memref<16x128xf32, #tpu.memory_space<vmem>>, vector<16x128xf32>
    tpu.vector_store %arg7[%c0_96, %c0_97], %388 {strides = array<i32>} : memref<16x128xf32, #tpu.memory_space<vmem>>, vector<16x128xf32>,
    return
  }
  func.func @transform_0(%arg0: i32) -> (i32, i32) {
    %c0_i32 = arith.constant 0 : i32
    %c0_i32_0 = arith.constant 0 : i32
    %c0_i32_1 = arith.constant 0 : i32
    return %c0_i32, %c0_i32_0 : i32, i32
  }
  func.func @transform_1(%arg0: i32) -> (i32, i32) {
    %c0_i32 = arith.constant 0 : i32
    %c0_i32_0 = arith.constant 0 : i32
    %c0_i32_1 = arith.constant 0 : i32
    return %c0_i32, %c0_i32_0 : i32, i32
  }
  func.func @transform_2(%arg0: i32) -> (i32, i32) {
    %c0_i32 = arith.constant 0 : i32
    %c0_i32_0 = arith.constant 0 : i32
    %c0_i32_1 = arith.constant 0 : i32
    return %c0_i32, %c0_i32_0 : i32, i32
  }
  func.func @transform_3(%arg0: i32) -> (i32, i32) {
    %c0_i32 = arith.constant 0 : i32
    %c0_i32_0 = arith.constant 0 : i32
    %c0_i32_1 = arith.constant 0 : i32
    return %c0_i32, %c0_i32_0 : i32, i32
  }
  func.func @transform_4(%arg0: i32) -> (i32, i32) {
    %c0_i32 = arith.constant 0 : i32
    %c0_i32_0 = arith.constant 0 : i32
    %c0_i32_1 = arith.constant 0 : i32
    return %c0_i32, %c0_i32_0 : i32, i32
  }
  func.func @transform_5(%arg0: i32) -> (i32, i32, i32) {
    %c0_i32 = arith.constant 0 : i32
    %c0_i32_0 = arith.constant 0 : i32
    %c0_i32_1 = arith.constant 0 : i32
    %c0_i32_2 = arith.constant 0 : i32
    return %c0_i32, %c0_i32_0, %c0_i32_1 : i32, i32, i32
  }
  func.func @transform_6(%arg0: i32) -> (i32, i32) {
    %c0_i32 = arith.constant 0 : i32
    %c0_i32_0 = arith.constant 0 : i32
    %c0_i32_1 = arith.constant 0 : i32
    return %c0_i32, %c0_i32_0 : i32, i32
  }
}

</mosaic_0001>

<llo_original>
// kernel: tpu_custom_call.1
$region0: #{tpu_custom_call.1}
  #allocation0 [shape = 'u32[]', space=smem, size = 0x4, offset = 0x4, fixed_abs, tag = 'smem constant byte address 0x4 - core index']
  #allocation1 [shape = 'u32[144,128]{1,0:T(1,128)}', space=vmem, size = 0x12000, scoped, tag = 'internal scratch']
  %s0 = inlined_call_operand.vmem [shape: s32[16,1], index: 0, kind: input, shape index: {}]
  %s1 = inlined_call_operand.vmem [shape: f32[16,16], index: 1, kind: input, shape index: {}]
  %s2 = inlined_call_operand.vmem [shape: f32[128,32], index: 2, kind: input, shape index: {}]
  %s3 = inlined_call_operand.vmem [shape: bf16[32,384], index: 3, kind: input, shape index: {}]
  %s4 = inlined_call_operand.vmem [shape: f32[27,128], index: 4, kind: input, shape index: {}]
  %s5 = inlined_call_operand.hbm [shape: f32[2,16,32], index: 5, kind: output, shape index: {0}]
  %s6 = inlined_call_operand.hbm [shape: f32[16,128], index: 6, kind: output, shape index: {1}]
  %7 = xla_tuple %s5, %s6
  %s8 = sld [smem:[#allocation0]]
  $region38: #{tpu_custom_call.1} parent=0
    _
  %s10 = ssub.s32 1, %s8
  %s11 = scalar_select 0, %s10, %s8
  $region1: #{tpu_custom_call.1} parent=0
    #allocation2 [shape = 'u8[16384]{0}', space=vmem, size = 0x4000, scoped, tag = 'output window, operand 0, single buffered']
    #allocation3 [shape = 's32[1]{0}', space=sflag, size = 0x4, scoped, tag = 'scoped memory for tpu_custom_call.1']
    #allocation4 [shape = 'u8[8192]{0}', space=vmem, size = 0x2000, scoped, tag = 'output window, operand 1, single buffered']
    #allocation5 [shape = 's32[1]{0}', space=sflag, size = 0x4, scoped, tag = 'scoped memory for tpu_custom_call.1']
    %12 = vsyncpa [#allocation3], 0
    %13 = vsyncpa [#allocation5], 0
    // Predicated region
    $region2: #{tpu_custom_call.1} parent=1 // pred_check
      _
    $region3: #{tpu_custom_call.1} parent=1 // pred_check_branch
      %15 = sbr.rel (0) target = $region5
    $region4: #{tpu_custom_call.1} parent=1 // pred_region
      _
    $region5: #{tpu_custom_call.1} parent=1 // pred_fallthru
      _
    // Predicated region
    $region6: #{tpu_custom_call.1} parent=1 // pred_check
      _
    $region7: #{tpu_custom_call.1} parent=1 // pred_check_branch
      %17 = sbr.rel (0) target = $region9
    $region8: #{tpu_custom_call.1} parent=1 // pred_region
      _
    $region9: #{tpu_custom_call.1} parent=1 // pred_fallthru
      _
    // Predicated region
    $region10: #{tpu_custom_call.1} parent=1 // pred_check
      _
    $region11: #{tpu_custom_call.1} parent=1 // pred_check_branch
      %19 = sbr.rel (0) target = $region13
    $region12: #{tpu_custom_call.1} parent=1 // pred_region
      _
    $region13: #{tpu_custom_call.1} parent=1 // pred_fallthru
      _
    // Predicated region
    $region14: #{tpu_custom_call.1} parent=1 // pred_check
      _
    $region15: #{tpu_custom_call.1} parent=1 // pred_check_branch
      %21 = sbr.rel (0) target = $region17
    $region16: #{tpu_custom_call.1} parent=1 // pred_region
      _
    $region17: #{tpu_custom_call.1} parent=1 // pred_fallthru
      _
    // Predicated region
    $region18: #{tpu_custom_call.1} parent=1 // pred_check
      _
    $region19: #{tpu_custom_call.1} parent=1 // pred_check_branch
      %23 = sbr.rel (0) target = $region21
    $region20: #{tpu_custom_call.1} parent=1 // pred_region
      _
    $region21: #{tpu_custom_call.1} parent=1 // pred_fallthru
      _
    %v25 = vld [vmem:[%s4] sm:$0xff]
    %v26 = vld [vmem:[%s4 + $0x8] sm:$0xff]
    %v27 = vld [vmem:[%s4 + $0x10] sm:$0xff]
    %v28 = vld [vmem:[%s4 + $0x18] sm:$0x7]
    %v29 = vld [vmem:[%s3] sm:$0xff]
    %v30 = vld [vmem:[%s3 + $0x8] sm:$0xf]
    %v31 = vld [vmem:[%s3 + $0xc] sm:$0xff]
    %v32 = vld [vmem:[%s3 + $0x14] sm:$0xf]
    %v33 = vld [vmem:[%s3 + $0x18] sm:$0xff]
    %v34 = vld [vmem:[%s3 + $0x20] sm:$0xf]
    %v35 = vld [vmem:[%s3 + $0x24] sm:$0xff]
    %v36 = vld [vmem:[%s3 + $0x2c] sm:$0xf]
    %v37 = vld [vmem:[%s1] sm:$0xff]
    %v38 = vld [vmem:[%s1 + $0x8] sm:$0xff]
    %v39 = vld [vmem:[%s0] sm:$0xff]
    %v40 = vld [vmem:[%s0 + $0x8] sm:$0xff]
    %v41 = vlaneseq
    %v42 = vand.u32 %v41, 127
    %43 = vset.pattern.permute.xlu0 0
    %44 = vperm.xlu0 %43, %v39
    %v45 = vpop.permute.xlu0 %44
    %46 = vset.pattern.permute.xlu0 0
    %47 = vperm.xlu0 %46, %v40
    %v48 = vpop.permute.xlu0 %47
    %vm49 = vcmp.eq.s32.totalorder %v42, %v45
    %vm50 = vcmp.eq.s32.totalorder %v42, %v48
    %v51 = vsel %vm49, 1, 0
    %v52 = vsel %vm50, 1, 0
    %v53 = vcvt.s32.f32 %v51
    %v54 = vcvt.s32.f32 %v52
    %v55 = vld [vmem:[%s2] sm:$0xff]
    %v56 = vld [vmem:[%s2 + $0x8] sm:$0xff]
    %v57 = vld [vmem:[%s2 + $0x10] sm:$0xff]
    %v58 = vld [vmem:[%s2 + $0x18] sm:$0xff]
    %v59 = vld [vmem:[%s2 + $0x20] sm:$0xff]
    %v60 = vld [vmem:[%s2 + $0x28] sm:$0xff]
    %v61 = vld [vmem:[%s2 + $0x30] sm:$0xff]
    %v62 = vld [vmem:[%s2 + $0x38] sm:$0xff]
    %v63 = vld [vmem:[%s2 + $0x40] sm:$0xff]
    %v64 = vld [vmem:[%s2 + $0x48] sm:$0xff]
    %v65 = vld [vmem:[%s2 + $0x50] sm:$0xff]
    %v66 = vld [vmem:[%s2 + $0x58] sm:$0xff]
    %v67 = vld [vmem:[%s2 + $0x60] sm:$0xff]
    %v68 = vld [vmem:[%s2 + $0x68] sm:$0xff]
    %v69 = vld [vmem:[%s2 + $0x70] sm:$0xff]
    %v70 = vld [vmem:[%s2 + $0x78] sm:$0xff]
    %vm74 = vcmask 1044480
    %v75 = vrot.slane %v26, 3
    %v76 = vrot.slane %v27, 3
    %v77 = vsel %vm74, %v75, %v76
    %v78 = vrot.slane %v28, 3
    %v79 = vsel %vm74, %v76, %v78
    %82 = vmatprep.subr.mxu0 0.0
    %83 = vmatpush1.msra.mxu0 %v55
    %84 = vmatprep.subr.mxu0 0.0
    %85 = vmatpush1.msra.mxu0 %v56
    %86 = vmatprep.subr.mxu0 0.0
    %87 = vmatpush1.msra.mxu0 %v57
    %88 = vmatprep.subr.mxu0 0.0
    %89 = vmatpush1.msra.mxu0 %v58
    %90 = vmatprep.subr.mxu0 0.0
    %91 = vmatpush1.msra.mxu0 %v59
    %92 = vmatprep.subr.mxu0 0.0
    %93 = vmatpush1.msra.mxu0 %v60
    %94 = vmatprep.subr.mxu0 0.0
    %95 = vmatpush1.msra.mxu0 %v61
    %96 = vmatprep.subr.mxu0 0.0
    %97 = vmatpush1.msra.mxu0 %v62
    %98 = vmatprep.subr.mxu0 0.0
    %99 = vmatpush1.msra.mxu0 %v63
    %100 = vmatprep.subr.mxu0 0.0
    %101 = vmatpush1.msra.mxu0 %v64
    %102 = vmatprep.subr.mxu0 0.0
    %103 = vmatpush1.msra.mxu0 %v65
    %104 = vmatprep.subr.mxu0 0.0
    %105 = vmatpush1.msra.mxu0 %v66
    %106 = vmatprep.subr.mxu0 0.0
    %107 = vmatpush1.msra.mxu0 %v67
    %108 = vmatprep.subr.mxu0 0.0
    %109 = vmatpush1.msra.mxu0 %v68
    %110 = vmatprep.subr.mxu0 0.0
    %111 = vmatpush1.msra.mxu0 %v69
    %112 = vmatprep.subr.mxu0 0.0
    %113 = vmatpush1.msra.mxu0 %v70
    %114 = vmatprep.subr.mxu0 0.0
    %115 = vmatpush1.msra.mxu0 0.0
    %116 = vmatprep.subr.mxu0 0.0
    %117 = vmatpush1.msra.mxu0 0.0
    %118 = vmatprep.subr.mxu0 0.0
    %119 = vmatpush1.msra.mxu0 0.0
    %120 = vmatprep.subr.mxu0 0.0
    %121 = vmatpush1.msra.mxu0 0.0
    %122 = vmatprep.subr.mxu0 0.0
    %123 = vmatpush1.msra.mxu0 0.0
    %124 = vmatprep.subr.mxu0 0.0
    %125 = vmatpush1.msra.mxu0 0.0
    %126 = vmatprep.subr.mxu0 0.0
    %127 = vmatpush1.msra.mxu0 0.0
    %128 = vmatprep.subr.mxu0 0.0
    %129 = vmatpush1.msra.mxu0 0.0
    %130 = vmatprep.subr.mxu0 0.0
    %131 = vmatpush1.msra.mxu0 0.0
    %132 = vmatprep.subr.mxu0 0.0
    %133 = vmatpush1.msra.mxu0 0.0
    %134 = vmatprep.subr.mxu0 0.0
    %135 = vmatpush1.msra.mxu0 0.0
    %136 = vmatprep.subr.mxu0 0.0
    %137 = vmatpush1.msra.mxu0 0.0
    %138 = vmatprep.subr.mxu0 0.0
    %139 = vmatpush1.msra.mxu0 0.0
    %140 = vmatprep.subr.mxu0 0.0
    %141 = vmatpush1.msra.mxu0 0.0
    %142 = vmatprep.subr.mxu0 0.0
    %143 = vmatpush1.msra.mxu0 0.0
    %144 = vmatprep.subr.mxu0 0.0
    %145 = vmatpush1.msra.mxu0 0.0
    %146 = vmatprep.mubr.f32.mxu0 0.0
    %147 = vmatmul.mubr.f32.gmra.mrb[0].mxu0 %v53
    %v148 = vpop.f32.mrb[0].mxu0
    %v149 = vadd.f32 %v77, %v148
    %v150 = vpop.f32.mrb[0].mxu0
    %151 = vmatprep.mubr.f32.mxu0 0.0
    %152 = vmatmul.mubr.f32.gmra.mrb[0].mxu0 %v54
    %v153 = vpop.f32.mrb[0].mxu0
    %v154 = vadd.f32 %v79, %v153
    %v155 = vpop.f32.mrb[0].mxu0
    %156 = vdwg.mxu0
    %vm157 = vcmask 261120
    %v158 = vsel %vm157, %v149, 0.0
    %159 = vadd.xlane.f32.xlu0 %v158
    %v160 = vpop.xlane.xlu0 %159
    %v161 = vsel %vm157, %v154, 0.0
    %162 = vadd.xlane.f32.xlu0 %v161
    %v163 = vpop.xlane.xlu0 %162
    %v164 = vrcp.pop 32.0
    %v165 = vmul.f32 %v160, %v164
    %v166 = vmul.f32 %v163, %v164
    %v167 = vsub.f32 %v149, %v165
    %v168 = vsub.f32 %v154, %v166
    %v169 = vmul.f32 %v167, %v167
    %v170 = vmul.f32 %v168, %v168
    %v171 = vsel %vm157, %v169, 0.0
    %172 = vadd.xlane.f32.xlu0 %v171
    %v173 = vpop.xlane.xlu0 %172
    %v174 = vsel %vm157, %v170, 0.0
    %175 = vadd.xlane.f32.xlu0 %v174
    %v176 = vpop.xlane.xlu0 %175
    %v177 = vmul.f32 %v173, %v164
    %v178 = vmul.f32 %v176, %v164
    %v179 = vadd.f32 %v177, 1e-12
    %v180 = vadd.f32 %v178, 1e-12
    %v181 = vrsqrt.pop %v179
    %v182 = vrsqrt.pop %v180
    %v183 = vmul.f32 %v167, %v181
    %v184 = vmul.f32 %v168, %v182
    %v185 = vlaneseq
    %v186 = vshrl.u32 %v185, 7
    %v187 = vsub.s32 0, %v186
    %v188 = vrot.slane %v25, %v187
    %v189 = vmul.f32 %v183, %v188
    %v190 = vmul.f32 %v184, %v188
    %v191 = vlaneseq
    %v192 = vshrl.u32 %v191, 7
    %v193 = vsub.s32 1, %v192
    %v194 = vrot.slane %v25, %v193
    %v195 = vadd.f32 %v189, %v194
    %v196 = vadd.f32 %v190, %v194
    %v197 = vpack.c.bf16 %v196, %v195
    %v198 = vlaneseq
    %v199 = vshrl.u32 %v198, 7
    %v200 = vsub.s32 2, %v199
    %v201 = vrot.slane %v25, %v200
    %v206 = vunpack.c.l.b16 %v29
    %v207 = vunpack.c.l.b16 %v31
    %v208 = vunpack.c.l.b16 %v33
    %v209 = vunpack.c.l.b16 %v35
    %v210 = vpack.c.b16 %v207, %v206
    %v211 = vpack.c.b16 %v209, %v208
    %v215 = vsel %vm157, %v197, 0
    %217 = vmatprep.subr.bf16.mxu0 0
    %218 = vmatpush1.bf16.msra.mxu0 %v210
    %219 = vmatprep.subr.bf16.mxu0 0
    %220 = vmatpush1.bf16.msra.mxu0 %v211
    %221 = vmatprep.subr.bf16.mxu0 0
    %222 = vmatpush1.bf16.msra.mxu0 0
    %223 = vmatprep.subr.bf16.mxu0 0
    %224 = vmatpush1.bf16.msra.mxu0 0
    %225 = vmatprep.subr.bf16.mxu0 0
    %226 = vmatpush1.bf16.msra.mxu0 0
    %227 = vmatprep.subr.bf16.mxu0 0
    %228 = vmatpush1.bf16.msra.mxu0 0
    %229 = vmatprep.subr.bf16.mxu0 0
    %230 = vmatpush1.bf16.msra.mxu0 0
    %231 = vmatprep.subr.bf16.mxu0 0
    %232 = vmatpush1.bf16.msra.mxu0 0
    %233 = vmatprep.subr.bf16.mxu0 0
    %234 = vmatpush1.bf16.msra.mxu0 0
    %235 = vmatprep.subr.bf16.mxu0 0
    %236 = vmatpush1.bf16.msra.mxu0 0
    %237 = vmatprep.subr.bf16.mxu0 0
    %238 = vmatpush1.bf16.msra.mxu0 0
    %239 = vmatprep.subr.bf16.mxu0 0
    %240 = vmatpush1.bf16.msra.mxu0 0
    %241 = vmatprep.subr.bf16.mxu0 0
    %242 = vmatpush1.bf16.msra.mxu0 0
    %243 = vmatprep.subr.bf16.mxu0 0
    %244 = vmatpush1.bf16.msra.mxu0 0
    %245 = vmatprep.subr.bf16.mxu0 0
    %246 = vmatpush1.bf16.msra.mxu0 0
    %247 = vmatprep.subr.bf16.mxu0 0
    %248 = vmatpush1.bf16.msra.mxu0 0
    %249 = vmatprep.mubr.bf16.mxu0 0
    %250 = vmatmul.mubr.bf16.gmra.mrb[0].mxu0 %v215
    %v251 = vpop.f32.mrb[0].mxu0
    %v252 = vadd.f32 %v201, %v251
    %v253 = vpop.f32.mrb[0].mxu0
    %v254 = vpop.f32.mrb[0].mxu0
    %v255 = vadd.f32 %v201, %v254
    %v256 = vpop.f32.mrb[0].mxu0
    %257 = vdwg.mxu0
    %v258 = vpack.c.bf16 %v255, %v252
    %260 = vrot.lane.b32.xlu0 %v258, 96
    %v261 = vpop.permute.xlu0 %260
    %vm262 = vcmask 64512
    %v264 = vsel %vm262, %v258, 0
    %v267 = vsel %vm262, %v261, 0
    %269 = vmatprep.subr.bf16.mxu0 0
    %270 = vmatpush1.bf16.xpose.msra.mxu0 %v267
    %271 = vmatprep.subr.bf16.mxu0 0
    %272 = vmatpush1.bf16.xpose.msra.mxu0 0
    %273 = vmatprep.subr.bf16.mxu0 0
    %274 = vmatpush1.bf16.xpose.msra.mxu0 0
    %275 = vmatprep.subr.bf16.mxu0 0
    %276 = vmatpush1.bf16.xpose.msra.mxu0 0
    %277 = vmatprep.subr.bf16.mxu0 0
    %278 = vmatpush1.bf16.xpose.msra.mxu0 0
    %279 = vmatprep.subr.bf16.mxu0 0
    %280 = vmatpush1.bf16.xpose.msra.mxu0 0
    %281 = vmatprep.subr.bf16.mxu0 0
    %282 = vmatpush1.bf16.xpose.msra.mxu0 0
    %283 = vmatprep.subr.bf16.mxu0 0
    %284 = vmatpush1.bf16.xpose.msra.mxu0 0
    %285 = vmatprep.subr.bf16.mxu0 0
    %286 = vmatpush1.bf16.xpose.msra.mxu0 0
    %287 = vmatprep.subr.bf16.mxu0 0
    %288 = vmatpush1.bf16.xpose.msra.mxu0 0
    %289 = vmatprep.subr.bf16.mxu0 0
    %290 = vmatpush1.bf16.xpose.msra.mxu0 0
    %291 = vmatprep.subr.bf16.mxu0 0
    %292 = vmatpush1.bf16.xpose.msra.mxu0 0
    %293 = vmatprep.subr.bf16.mxu0 0
    %294 = vmatpush1.bf16.xpose.msra.mxu0 0
    %295 = vmatprep.subr.bf16.mxu0 0
    %296 = vmatpush1.bf16.xpose.msra.mxu0 0
    %297 = vmatprep.subr.bf16.mxu0 0
    %298 = vmatpush1.bf16.xpose.msra.mxu0 0
    %299 = vmatprep.subr.bf16.mxu0 0
    %300 = vmatpush1.bf16.xpose.msra.mxu0 0
    %301 = vmatprep.mubr.bf16.mxu0 0
    %302 = vmatmul.mubr.bf16.gmra.mrb[0].mxu0 %v264
    %v303 = vpop.f32.mrb[0].mxu0
    %v304 = vadd.f32 0.0, %v303
    %v305 = vpop.f32.mrb[0].mxu0
    %v306 = vpop.f32.mrb[0].mxu0
    %v307 = vadd.f32 0.0, %v306
    %v308 = vpop.f32.mrb[0].mxu0
    %309 = vdwg.mxu0
    %v310 = vmul.f32 %v304, 0.35355338
    %v311 = vmul.f32 %v307, 0.35355338
    %v312 = vadd.f32 %v310, %v37
    %v313 = vadd.f32 %v311, %v38
    %vm314 = vcmask 130048
    %v315 = vsel %vm314, %v312, -inf
    %316 = vmax.xlane.f32.xlu0 %v315
    %v317 = vpop.xlane.xlu0 %316
    %v318 = vsel %vm314, %v313, -inf
    %319 = vmax.xlane.f32.xlu0 %v318
    %v320 = vpop.xlane.xlu0 %319
    %v321 = vsub.f32 %v312, %v317
    %v322 = vsub.f32 %v313, %v320
    %v323 = vmul.f32 %v321, 1.442695
    %v324 = vpow.pop %v323
    %v325 = vmul.f32 %v322, 1.442695
    %v326 = vpow.pop %v325
    %v327 = vsel %vm314, %v324, 0.0
    %328 = vadd.xlane.f32.xlu0 %v327
    %v329 = vpop.xlane.xlu0 %328
    %v330 = vsel %vm314, %v326, 0.0
    %331 = vadd.xlane.f32.xlu0 %v330
    %v332 = vpop.xlane.xlu0 %331
    %v333 = vrcp.pop %v329
    %v334 = vrcp.pop %v332
    %v335 = vmul.f32 %v324, %v333
    %v336 = vmul.f32 %v326, %v334
    %v337 = vpack.c.bf16 %v336, %v335
    %338 = vrot.lane.b32.xlu0 %v258, 64
    %v339 = vpop.permute.xlu0 %338
    %v342 = vsel %vm314, %v337, 0
    %344 = vmatprep.subr.bf16.mxu0 0
    %345 = vmatpush1.bf16.msra.mxu0 %v339
    %346 = vmatprep.subr.bf16.mxu0 0
    %347 = vmatpush1.bf16.msra.mxu0 0
    %348 = vmatprep.subr.bf16.mxu0 0
    %349 = vmatpush1.bf16.msra.mxu0 0
    %350 = vmatprep.subr.bf16.mxu0 0
    %351 = vmatpush1.bf16.msra.mxu0 0
    %352 = vmatprep.subr.bf16.mxu0 0
    %353 = vmatpush1.bf16.msra.mxu0 0
    %354 = vmatprep.subr.bf16.mxu0 0
    %355 = vmatpush1.bf16.msra.mxu0 0
    %356 = vmatprep.subr.bf16.mxu0 0
    %357 = vmatpush1.bf16.msra.mxu0 0
    %358 = vmatprep.subr.bf16.mxu0 0
    %359 = vmatpush1.bf16.msra.mxu0 0
    %360 = vmatprep.subr.bf16.mxu0 0
    %361 = vmatpush1.bf16.msra.mxu0 0
    %362 = vmatprep.subr.bf16.mxu0 0
    %363 = vmatpush1.bf16.msra.mxu0 0
    %364 = vmatprep.subr.bf16.mxu0 0
    %365 = vmatpush1.bf16.msra.mxu0 0
    %366 = vmatprep.subr.bf16.mxu0 0
    %367 = vmatpush1.bf16.msra.mxu0 0
    %368 = vmatprep.subr.bf16.mxu0 0
    %369 = vmatpush1.bf16.msra.mxu0 0
    %370 = vmatprep.subr.bf16.mxu0 0
    %371 = vmatpush1.bf16.msra.mxu0 0
    %372 = vmatprep.subr.bf16.mxu0 0
    %373 = vmatpush1.bf16.msra.mxu0 0
    %374 = vmatprep.subr.bf16.mxu0 0
    %375 = vmatpush1.bf16.msra.mxu0 0
    %376 = vmatprep.mubr.bf16.mxu0 0
    %377 = vmatmul.mubr.bf16.gmra.mrb[0].mxu0 %v342
    %v378 = vpop.f32.mrb[0].mxu0
    %v379 = vadd.f32 0.0, %v378
    %v380 = vpop.f32.mrb[0].mxu0
    %v381 = vpop.f32.mrb[0].mxu0
    %v382 = vadd.f32 0.0, %v381
    %v383 = vpop.f32.mrb[0].mxu0
    %384 = vdwg.mxu0
    %385 = vrot.lane.b32.xlu0 %v258, 120
    %v386 = vpop.permute.xlu0 %385
    %387 = vrot.lane.b32.xlu0 %v258, 88
    %v388 = vpop.permute.xlu0 %387
    %v390 = vsel %vm262, %v386, 0
    %v393 = vsel %vm262, %v388, 0
    %395 = vmatprep.subr.bf16.mxu0 0
    %396 = vmatpush1.bf16.xpose.msra.mxu0 %v393
    %397 = vmatprep.subr.bf16.mxu0 0
    %398 = vmatpush1.bf16.xpose.msra.mxu0 0
    %399 = vmatprep.subr.bf16.mxu0 0
    %400 = vmatpush1.bf16.xpose.msra.mxu0 0
    %401 = vmatprep.subr.bf16.mxu0 0
    %402 = vmatpush1.bf16.xpose.msra.mxu0 0
    %403 = vmatprep.subr.bf16.mxu0 0
    %404 = vmatpush1.bf16.xpose.msra.mxu0 0
    %405 = vmatprep.subr.bf16.mxu0 0
    %406 = vmatpush1.bf16.xpose.msra.mxu0 0
    %407 = vmatprep.subr.bf16.mxu0 0
    %408 = vmatpush1.bf16.xpose.msra.mxu0 0
    %409 = vmatprep.subr.bf16.mxu0 0
    %410 = vmatpush1.bf16.xpose.msra.mxu0 0
    %411 = vmatprep.subr.bf16.mxu0 0
    %412 = vmatpush1.bf16.xpose.msra.mxu0 0
    %413 = vmatprep.subr.bf16.mxu0 0
    %414 = vmatpush1.bf16.xpose.msra.mxu0 0
    %415 = vmatprep.subr.bf16.mxu0 0
    %416 = vmatpush1.bf16.xpose.msra.mxu0 0
    %417 = vmatprep.subr.bf16.mxu0 0
    %418 = vmatpush1.bf16.xpose.msra.mxu0 0
    %419 = vmatprep.subr.bf16.mxu0 0
    %420 = vmatpush1.bf16.xpose.msra.mxu0 0
    %421 = vmatprep.subr.bf16.mxu0 0
    %422 = vmatpush1.bf16.xpose.msra.mxu0 0
    %423 = vmatprep.subr.bf16.mxu0 0
    %424 = vmatpush1.bf16.xpose.msra.mxu0 0
    %425 = vmatprep.subr.bf16.mxu0 0
    %426 = vmatpush1.bf16.xpose.msra.mxu0 0
    %427 = vmatprep.mubr.bf16.mxu0 0
    %428 = vmatmul.mubr.bf16.gmra.mrb[0].mxu0 %v390
    %v429 = vpop.f32.mrb[0].mxu0
    %v430 = vadd.f32 0.0, %v429
    %v431 = vpop.f32.mrb[0].mxu0
    %v432 = vpop.f32.mrb[0].mxu0
    %v433 = vadd.f32 0.0, %v432
    %v434 = vpop.f32.mrb[0].mxu0
    %435 = vdwg.mxu0
    %v436 = vmul.f32 %v430, 0.35355338
    %v437 = vmul.f32 %v433, 0.35355338
    %v438 = vadd.f32 %v436, %v37
    %v439 = vadd.f32 %v437, %v38
    %v440 = vsel %vm314, %v438, -inf
    %441 = vmax.xlane.f32.xlu0 %v440
    %v442 = vpop.xlane.xlu0 %441
    %v443 = vsel %vm314, %v439, -inf
    %444 = vmax.xlane.f32.xlu0 %v443
    %v445 = vpop.xlane.xlu0 %444
    %v446 = vsub.f32 %v438, %v442
    %v447 = vsub.f32 %v439, %v445
    %v448 = vmul.f32 %v446, 1.442695
    %v449 = vpow.pop %v448
    %v450 = vmul.f32 %v447, 1.442695
    %v451 = vpow.pop %v450
    %v452 = vsel %vm314, %v449, 0.0
    %453 = vadd.xlane.f32.xlu0 %v452
    %v454 = vpop.xlane.xlu0 %453
    %v455 = vsel %vm314, %v451, 0.0
    %456 = vadd.xlane.f32.xlu0 %v455
    %v457 = vpop.xlane.xlu0 %456
    %v458 = vrcp.pop %v454
    %v459 = vrcp.pop %v457
    %v460 = vmul.f32 %v449, %v458
    %v461 = vmul.f32 %v451, %v459
    %v462 = vpack.c.bf16 %v461, %v460
    %463 = vrot.lane.b32.xlu0 %v258, 56
    %v464 = vpop.permute.xlu0 %463
    %v467 = vsel %vm314, %v462, 0
    %469 = vmatprep.subr.bf16.mxu0 0
    %470 = vmatpush1.bf16.msra.mxu0 %v464
    %471 = vmatprep.subr.bf16.mxu0 0
    %472 = vmatpush1.bf16.msra.mxu0 0
    %473 = vmatprep.subr.bf16.mxu0 0
    %474 = vmatpush1.bf16.msra.mxu0 0
    %475 = vmatprep.subr.bf16.mxu0 0
    %476 = vmatpush1.bf16.msra.mxu0 0
    %477 = vmatprep.subr.bf16.mxu0 0
    %478 = vmatpush1.bf16.msra.mxu0 0
    %479 = vmatprep.subr.bf16.mxu0 0
    %480 = vmatpush1.bf16.msra.mxu0 0
    %481 = vmatprep.subr.bf16.mxu0 0
    %482 = vmatpush1.bf16.msra.mxu0 0
    %483 = vmatprep.subr.bf16.mxu0 0
    %484 = vmatpush1.bf16.msra.mxu0 0
    %485 = vmatprep.subr.bf16.mxu0 0
    %486 = vmatpush1.bf16.msra.mxu0 0
    %487 = vmatprep.subr.bf16.mxu0 0
    %488 = vmatpush1.bf16.msra.mxu0 0
    %489 = vmatprep.subr.bf16.mxu0 0
    %490 = vmatpush1.bf16.msra.mxu0 0
    %491 = vmatprep.subr.bf16.mxu0 0
    %492 = vmatpush1.bf16.msra.mxu0 0
    %493 = vmatprep.subr.bf16.mxu0 0
    %494 = vmatpush1.bf16.msra.mxu0 0
    %495 = vmatprep.subr.bf16.mxu0 0
    %496 = vmatpush1.bf16.msra.mxu0 0
    %497 = vmatprep.subr.bf16.mxu0 0
    %498 = vmatpush1.bf16.msra.mxu0 0
    %499 = vmatprep.subr.bf16.mxu0 0
    %500 = vmatpush1.bf16.msra.mxu0 0
    %501 = vmatprep.mubr.bf16.mxu0 0
    %502 = vmatmul.mubr.bf16.gmra.mrb[0].mxu0 %v467
    %v503 = vpop.f32.mrb[0].mxu0
    %v504 = vadd.f32 0.0, %v503
    %v505 = vpop.f32.mrb[0].mxu0
    %v506 = vpop.f32.mrb[0].mxu0
    %v507 = vadd.f32 0.0, %v506
    %v508 = vpop.f32.mrb[0].mxu0
    %509 = vdwg.mxu0
    %510 = vrot.lane.b32.xlu0 %v258, 112
    %v511 = vpop.permute.xlu0 %510
    %512 = vrot.lane.b32.xlu0 %v258, 80
    %v513 = vpop.permute.xlu0 %512
    %v515 = vsel %vm262, %v511, 0
    %v518 = vsel %vm262, %v513, 0
    %520 = vmatprep.subr.bf16.mxu0 0
    %521 = vmatpush1.bf16.xpose.msra.mxu0 %v518
    %522 = vmatprep.subr.bf16.mxu0 0
    %523 = vmatpush1.bf16.xpose.msra.mxu0 0
    %524 = vmatprep.subr.bf16.mxu0 0
    %525 = vmatpush1.bf16.xpose.msra.mxu0 0
    %526 = vmatprep.subr.bf16.mxu0 0
    %527 = vmatpush1.bf16.xpose.msra.mxu0 0
    %528 = vmatprep.subr.bf16.mxu0 0
    %529 = vmatpush1.bf16.xpose.msra.mxu0 0
    %530 = vmatprep.subr.bf16.mxu0 0
    %531 = vmatpush1.bf16.xpose.msra.mxu0 0
    %532 = vmatprep.subr.bf16.mxu0 0
    %533 = vmatpush1.bf16.xpose.msra.mxu0 0
    %534 = vmatprep.subr.bf16.mxu0 0
    %535 = vmatpush1.bf16.xpose.msra.mxu0 0
    %536 = vmatprep.subr.bf16.mxu0 0
    %537 = vmatpush1.bf16.xpose.msra.mxu0 0
    %538 = vmatprep.subr.bf16.mxu0 0
    %539 = vmatpush1.bf16.xpose.msra.mxu0 0
    %540 = vmatprep.subr.bf16.mxu0 0
    %541 = vmatpush1.bf16.xpose.msra.mxu0 0
    %542 = vmatprep.subr.bf16.mxu0 0
    %543 = vmatpush1.bf16.xpose.msra.mxu0 0
    %544 = vmatprep.subr.bf16.mxu0 0
    %545 = vmatpush1.bf16.xpose.msra.mxu0 0
    %546 = vmatprep.subr.bf16.mxu0 0
    %547 = vmatpush1.bf16.xpose.msra.mxu0 0
    %548 = vmatprep.subr.bf16.mxu0 0
    %549 = vmatpush1.bf16.xpose.msra.mxu0 0
    %550 = vmatprep.subr.bf16.mxu0 0
    %551 = vmatpush1.bf16.xpose.msra.mxu0 0
    %552 = vmatprep.mubr.bf16.mxu0 0
    %553 = vmatmul.mubr.bf16.gmra.mrb[0].mxu0 %v515
    %v554 = vpop.f32.mrb[0].mxu0
    %v555 = vadd.f32 0.0, %v554
    %v556 = vpop.f32.mrb[0].mxu0
    %v557 = vpop.f32.mrb[0].mxu0
    %v558 = vadd.f32 0.0, %v557
    %v559 = vpop.f32.mrb[0].mxu0
    %560 = vdwg.mxu0
    %v561 = vmul.f32 %v555, 0.35355338
    %v562 = vmul.f32 %v558, 0.35355338
    %v563 = vadd.f32 %v561, %v37
    %v564 = vadd.f32 %v562, %v38
    %v565 = vsel %vm314, %v563, -inf
    %566 = vmax.xlane.f32.xlu0 %v565
    %v567 = vpop.xlane.xlu0 %566
    %v568 = vsel %vm314, %v564, -inf
    %569 = vmax.xlane.f32.xlu0 %v568
    %v570 = vpop.xlane.xlu0 %569
    %v571 = vsub.f32 %v563, %v567
    %v572 = vsub.f32 %v564, %v570
    %v573 = vmul.f32 %v571, 1.442695
    %v574 = vpow.pop %v573
    %v575 = vmul.f32 %v572, 1.442695
    %v576 = vpow.pop %v575
    %v577 = vsel %vm314, %v574, 0.0
    %578 = vadd.xlane.f32.xlu0 %v577
    %v579 = vpop.xlane.xlu0 %578
    %v580 = vsel %vm314, %v576, 0.0
    %581 = vadd.xlane.f32.xlu0 %v580
    %v582 = vpop.xlane.xlu0 %581
    %v583 = vrcp.pop %v579
    %v584 = vrcp.pop %v582
    %v585 = vmul.f32 %v574, %v583
    %v586 = vmul.f32 %v576, %v584
    %v587 = vpack.c.bf16 %v586, %v585
    %588 = vrot.lane.b32.xlu0 %v258, 48
    %v589 = vpop.permute.xlu0 %588
    %v592 = vsel %vm314, %v587, 0
    %594 = vmatprep.subr.bf16.mxu0 0
    %595 = vmatpush1.bf16.msra.mxu0 %v589
    %596 = vmatprep.subr.bf16.mxu0 0
    %597 = vmatpush1.bf16.msra.mxu0 0
    %598 = vmatprep.subr.bf16.mxu0 0
    %599 = vmatpush1.bf16.msra.mxu0 0
    %600 = vmatprep.subr.bf16.mxu0 0
    %601 = vmatpush1.bf16.msra.mxu0 0
    %602 = vmatprep.subr.bf16.mxu0 0
    %603 = vmatpush1.bf16.msra.mxu0 0
    %604 = vmatprep.subr.bf16.mxu0 0
    %605 = vmatpush1.bf16.msra.mxu0 0
    %606 = vmatprep.subr.bf16.mxu0 0
    %607 = vmatpush1.bf16.msra.mxu0 0
    %608 = vmatprep.subr.bf16.mxu0 0
    %609 = vmatpush1.bf16.msra.mxu0 0
    %610 = vmatprep.subr.bf16.mxu0 0
    %611 = vmatpush1.bf16.msra.mxu0 0
    %612 = vmatprep.subr.bf16.mxu0 0
    %613 = vmatpush1.bf16.msra.mxu0 0
    %614 = vmatprep.subr.bf16.mxu0 0
    %615 = vmatpush1.bf16.msra.mxu0 0
    %616 = vmatprep.subr.bf16.mxu0 0
    %617 = vmatpush1.bf16.msra.mxu0 0
    %618 = vmatprep.subr.bf16.mxu0 0
    %619 = vmatpush1.bf16.msra.mxu0 0
    %620 = vmatprep.subr.bf16.mxu0 0
    %621 = vmatpush1.bf16.msra.mxu0 0
    %622 = vmatprep.subr.bf16.mxu0 0
    %623 = vmatpush1.bf16.msra.mxu0 0
    %624 = vmatprep.subr.bf16.mxu0 0
    %625 = vmatpush1.bf16.msra.mxu0 0
    %626 = vmatprep.mubr.bf16.mxu0 0
    %627 = vmatmul.mubr.bf16.gmra.mrb[0].mxu0 %v592
    %v628 = vpop.f32.mrb[0].mxu0
    %v629 = vadd.f32 0.0, %v628
    %v630 = vpop.f32.mrb[0].mxu0
    %v631 = vpop.f32.mrb[0].mxu0
    %v632 = vadd.f32 0.0, %v631
    %v633 = vpop.f32.mrb[0].mxu0
    %634 = vdwg.mxu0
    %635 = vrot.lane.b32.xlu0 %v258, 104
    %v636 = vpop.permute.xlu0 %635
    %637 = vrot.lane.b32.xlu0 %v258, 72
    %v638 = vpop.permute.xlu0 %637
    %v640 = vsel %vm262, %v636, 0
    %v643 = vsel %vm262, %v638, 0
    %645 = vmatprep.subr.bf16.mxu0 0
    %646 = vmatpush1.bf16.xpose.msra.mxu0 %v643
    %647 = vmatprep.subr.bf16.mxu0 0
    %648 = vmatpush1.bf16.xpose.msra.mxu0 0
    %649 = vmatprep.subr.bf16.mxu0 0
    %650 = vmatpush1.bf16.xpose.msra.mxu0 0
    %651 = vmatprep.subr.bf16.mxu0 0
    %652 = vmatpush1.bf16.xpose.msra.mxu0 0
    %653 = vmatprep.subr.bf16.mxu0 0
    %654 = vmatpush1.bf16.xpose.msra.mxu0 0
    %655 = vmatprep.subr.bf16.mxu0 0
    %656 = vmatpush1.bf16.xpose.msra.mxu0 0
    %657 = vmatprep.subr.bf16.mxu0 0
    %658 = vmatpush1.bf16.xpose.msra.mxu0 0
    %659 = vmatprep.subr.bf16.mxu0 0
    %660 = vmatpush1.bf16.xpose.msra.mxu0 0
    %661 = vmatprep.subr.bf16.mxu0 0
    %662 = vmatpush1.bf16.xpose.msra.mxu0 0
    %663 = vmatprep.subr.bf16.mxu0 0
    %664 = vmatpush1.bf16.xpose.msra.mxu0 0
    %665 = vmatprep.subr.bf16.mxu0 0
    %666 = vmatpush1.bf16.xpose.msra.mxu0 0
    %667 = vmatprep.subr.bf16.mxu0 0
    %668 = vmatpush1.bf16.xpose.msra.mxu0 0
    %669 = vmatprep.subr.bf16.mxu0 0
    %670 = vmatpush1.bf16.xpose.msra.mxu0 0
    %671 = vmatprep.subr.bf16.mxu0 0
    %672 = vmatpush1.bf16.xpose.msra.mxu0 0
    %673 = vmatprep.subr.bf16.mxu0 0
    %674 = vmatpush1.bf16.xpose.msra.mxu0 0
    %675 = vmatprep.subr.bf16.mxu0 0
    %676 = vmatpush1.bf16.xpose.msra.mxu0 0
    %677 = vmatprep.mubr.bf16.mxu0 0
    %678 = vmatmul.mubr.bf16.gmra.mrb[0].mxu0 %v640
    %v679 = vpop.f32.mrb[0].mxu0
    %v680 = vadd.f32 0.0, %v679
    %v681 = vpop.f32.mrb[0].mxu0
    %v682 = vpop.f32.mrb[0].mxu0
    %v683 = vadd.f32 0.0, %v682
    %v684 = vpop.f32.mrb[0].mxu0
    %685 = vdwg.mxu0
    %v686 = vmul.f32 %v680, 0.35355338
    %v687 = vmul.f32 %v683, 0.35355338
    %v688 = vadd.f32 %v686, %v37
    %v689 = vadd.f32 %v687, %v38
    %v690 = vsel %vm314, %v688, -inf
    %691 = vmax.xlane.f32.xlu0 %v690
    %v692 = vpop.xlane.xlu0 %691
    %v693 = vsel %vm314, %v689, -inf
    %694 = vmax.xlane.f32.xlu0 %v693
    %v695 = vpop.xlane.xlu0 %694
    %v696 = vsub.f32 %v688, %v692
    %v697 = vsub.f32 %v689, %v695
    %v698 = vmul.f32 %v696, 1.442695
    %v699 = vpow.pop %v698
    %v700 = vmul.f32 %v697, 1.442695
    %v701 = vpow.pop %v700
    %v702 = vsel %vm314, %v699, 0.0
    %703 = vadd.xlane.f32.xlu0 %v702
    %v704 = vpop.xlane.xlu0 %703
    %v705 = vsel %vm314, %v701, 0.0
    %706 = vadd.xlane.f32.xlu0 %v705
    %v707 = vpop.xlane.xlu0 %706
    %v708 = vrcp.pop %v704
    %v709 = vrcp.pop %v707
    %v710 = vmul.f32 %v699, %v708
    %v711 = vmul.f32 %v701, %v709
    %v712 = vpack.c.bf16 %v711, %v710
    %713 = vrot.lane.b32.xlu0 %v258, 40
    %v714 = vpop.permute.xlu0 %713
    %v717 = vsel %vm314, %v712, 0
    %719 = vmatprep.subr.bf16.mxu0 0
    %720 = vmatpush1.bf16.msra.mxu0 %v714
    %721 = vmatprep.subr.bf16.mxu0 0
    %722 = vmatpush1.bf16.msra.mxu0 0
    %723 = vmatprep.subr.bf16.mxu0 0
    %724 = vmatpush1.bf16.msra.mxu0 0
    %725 = vmatprep.subr.bf16.mxu0 0
    %726 = vmatpush1.bf16.msra.mxu0 0
    %727 = vmatprep.subr.bf16.mxu0 0
    %728 = vmatpush1.bf16.msra.mxu0 0
    %729 = vmatprep.subr.bf16.mxu0 0
    %730 = vmatpush1.bf16.msra.mxu0 0
    %731 = vmatprep.subr.bf16.mxu0 0
    %732 = vmatpush1.bf16.msra.mxu0 0
    %733 = vmatprep.subr.bf16.mxu0 0
    %734 = vmatpush1.bf16.msra.mxu0 0
    %735 = vmatprep.subr.bf16.mxu0 0
    %736 = vmatpush1.bf16.msra.mxu0 0
    %737 = vmatprep.subr.bf16.mxu0 0
    %738 = vmatpush1.bf16.msra.mxu0 0
    %739 = vmatprep.subr.bf16.mxu0 0
    %740 = vmatpush1.bf16.msra.mxu0 0
    %741 = vmatprep.subr.bf16.mxu0 0
    %742 = vmatpush1.bf16.msra.mxu0 0
    %743 = vmatprep.subr.bf16.mxu0 0
    %744 = vmatpush1.bf16.msra.mxu0 0
    %745 = vmatprep.subr.bf16.mxu0 0
    %746 = vmatpush1.bf16.msra.mxu0 0
    %747 = vmatprep.subr.bf16.mxu0 0
    %748 = vmatpush1.bf16.msra.mxu0 0
    %749 = vmatprep.subr.bf16.mxu0 0
    %750 = vmatpush1.bf16.msra.mxu0 0
    %751 = vmatprep.mubr.bf16.mxu0 0
    %752 = vmatmul.mubr.bf16.gmra.mrb[0].mxu0 %v717
    %v753 = vpop.f32.mrb[0].mxu0
    %v754 = vadd.f32 0.0, %v753
    %v755 = vpop.f32.mrb[0].mxu0
    %v756 = vpop.f32.mrb[0].mxu0
    %v757 = vadd.f32 0.0, %v756
    %v758 = vpop.f32.mrb[0].mxu0
    %759 = vdwg.mxu0
    %762 = vrot.lane.b32.xlu0 %v504, 8
    %v763 = vpop.permute.xlu0 %762
    %764 = vrot.lane.b32.xlu0 %v507, 8
    %v765 = vpop.permute.xlu0 %764
    %770 = vrot.lane.b32.xlu0 %v629, 16
    %v771 = vpop.permute.xlu0 %770
    %772 = vrot.lane.b32.xlu0 %v632, 16
    %v773 = vpop.permute.xlu0 %772
    %778 = vrot.lane.b32.xlu0 %v754, 24
    %v779 = vpop.permute.xlu0 %778
    %780 = vrot.lane.b32.xlu0 %v757, 24
    %v781 = vpop.permute.xlu0 %780
    %v784 = vsel %vm262, %v379, %v763
    %v785 = vsel %vm262, %v382, %v765
    %v786 = vsel %vm314, %v784, %v771
    %v787 = vsel %vm314, %v785, %v773
    %vm788 = vcmask 195584
    %v789 = vsel %vm788, %v786, %v779
    %v790 = vsel %vm788, %v787, %v781
    %v791 = vpack.c.bf16 %v790, %v789
    %v792 = vlaneseq
    %v793 = vshrl.u32 %v792, 7
    %v794 = vsub.s32 3, %v793
    %v795 = vrot.slane %v25, %v794
    %796 = vrot.lane.b32.xlu0 %v210, 32
    %v797 = vpop.permute.xlu0 %796
    %798 = vrot.lane.b32.xlu0 %v211, 32
    %v799 = vpop.permute.xlu0 %798
    %v803 = vsel %vm157, %v791, 0
    %805 = vmatprep.subr.bf16.mxu0 0
    %806 = vmatpush1.bf16.msra.mxu0 %v797
    %807 = vmatprep.subr.bf16.mxu0 0
    %808 = vmatpush1.bf16.msra.mxu0 %v799
    %809 = vmatprep.subr.bf16.mxu0 0
    %810 = vmatpush1.bf16.msra.mxu0 0
    %811 = vmatprep.subr.bf16.mxu0 0
    %812 = vmatpush1.bf16.msra.mxu0 0
    %813 = vmatprep.subr.bf16.mxu0 0
    %814 = vmatpush1.bf16.msra.mxu0 0
    %815 = vmatprep.subr.bf16.mxu0 0
    %816 = vmatpush1.bf16.msra.mxu0 0
    %817 = vmatprep.subr.bf16.mxu0 0
    %818 = vmatpush1.bf16.msra.mxu0 0
    %819 = vmatprep.subr.bf16.mxu0 0
    %820 = vmatpush1.bf16.msra.mxu0 0
    %821 = vmatprep.subr.bf16.mxu0 0
    %822 = vmatpush1.bf16.msra.mxu0 0
    %823 = vmatprep.subr.bf16.mxu0 0
    %824 = vmatpush1.bf16.msra.mxu0 0
    %825 = vmatprep.subr.bf16.mxu0 0
    %826 = vmatpush1.bf16.msra.mxu0 0
    %827 = vmatprep.subr.bf16.mxu0 0
    %828 = vmatpush1.bf16.msra.mxu0 0
    %829 = vmatprep.subr.bf16.mxu0 0
    %830 = vmatpush1.bf16.msra.mxu0 0
    %831 = vmatprep.subr.bf16.mxu0 0
    %832 = vmatpush1.bf16.msra.mxu0 0
    %833 = vmatprep.subr.bf16.mxu0 0
    %834 = vmatpush1.bf16.msra.mxu0 0
    %835 = vmatprep.subr.bf16.mxu0 0
    %836 = vmatpush1.bf16.msra.mxu0 0
    %837 = vmatprep.mubr.bf16.mxu0 0
    %838 = vmatmul.mubr.bf16.gmra.mrb[0].mxu0 %v803
    %v839 = vpop.f32.mrb[0].mxu0
    %v840 = vadd.f32 %v795, %v839
    %v841 = vpop.f32.mrb[0].mxu0
    %v842 = vpop.f32.mrb[0].mxu0
    %v843 = vadd.f32 %v795, %v842
    %v844 = vpop.f32.mrb[0].mxu0
    %845 = vdwg.mxu0
    %v846 = vadd.f32 %v195, %v840
    %v847 = vadd.f32 %v196, %v843
    %v848 = vsel %vm157, %v846, 0.0
    %849 = vadd.xlane.f32.xlu0 %v848
    %v850 = vpop.xlane.xlu0 %849
    %v851 = vsel %vm157, %v847, 0.0
    %852 = vadd.xlane.f32.xlu0 %v851
    %v853 = vpop.xlane.xlu0 %852
    %v854 = vmul.f32 %v850, %v164
    %v855 = vmul.f32 %v853, %v164
    %v856 = vsub.f32 %v846, %v854
    %v857 = vsub.f32 %v847, %v855
    %v858 = vmul.f32 %v856, %v856
    %v859 = vmul.f32 %v857, %v857
    %v860 = vsel %vm157, %v858, 0.0
    %861 = vadd.xlane.f32.xlu0 %v860
    %v862 = vpop.xlane.xlu0 %861
    %v863 = vsel %vm157, %v859, 0.0
    %864 = vadd.xlane.f32.xlu0 %v863
    %v865 = vpop.xlane.xlu0 %864
    %v866 = vmul.f32 %v862, %v164
    %v867 = vmul.f32 %v865, %v164
    %v868 = vadd.f32 %v866, 1e-12
    %v869 = vadd.f32 %v867, 1e-12
    %v870 = vrsqrt.pop %v868
    %v871 = vrsqrt.pop %v869
    %v872 = vmul.f32 %v856, %v870
    %v873 = vmul.f32 %v857, %v871
    %v874 = vlaneseq
    %v875 = vshrl.u32 %v874, 7
    %v876 = vsub.s32 4, %v875
    %v877 = vrot.slane %v25, %v876
    %v878 = vmul.f32 %v872, %v877
    %v879 = vmul.f32 %v873, %v877
    %v880 = vlaneseq
    %v881 = vshrl.u32 %v880, 7
    %v882 = vsub.s32 5, %v881
    %v883 = vrot.slane %v25, %v882
    %v884 = vadd.f32 %v878, %v883
    %v885 = vadd.f32 %v879, %v883
    %v886 = vpack.c.bf16 %v885, %v884
    %v887 = vlaneseq
    %v888 = vshrl.u32 %v887, 7
    %v889 = vsub.s32 6, %v888
    %v890 = vrot.slane %v25, %v889
    %v891 = vunpack.c.h.b16 %v29
    %v892 = vunpack.c.h.b16 %v31
    %v893 = vunpack.c.h.b16 %v33
    %v894 = vunpack.c.h.b16 %v35
    %v895 = vpack.c.b16 %v892, %v891
    %v896 = vpack.c.b16 %v894, %v893
    %v900 = vsel %vm157, %v886, 0
    %902 = vmatprep.subr.bf16.mxu0 0
    %903 = vmatpush1.bf16.msra.mxu0 %v895
    %904 = vmatprep.subr.bf16.mxu0 0
    %905 = vmatpush1.bf16.msra.mxu0 %v896
    %906 = vmatprep.subr.bf16.mxu0 0
    %907 = vmatpush1.bf16.msra.mxu0 0
    %908 = vmatprep.subr.bf16.mxu0 0
    %909 = vmatpush1.bf16.msra.mxu0 0
    %910 = vmatprep.subr.bf16.mxu0 0
    %911 = vmatpush1.bf16.msra.mxu0 0
    %912 = vmatprep.subr.bf16.mxu0 0
    %913 = vmatpush1.bf16.msra.mxu0 0
    %914 = vmatprep.subr.bf16.mxu0 0
    %915 = vmatpush1.bf16.msra.mxu0 0
    %916 = vmatprep.subr.bf16.mxu0 0
    %917 = vmatpush1.bf16.msra.mxu0 0
    %918 = vmatprep.subr.bf16.mxu0 0
    %919 = vmatpush1.bf16.msra.mxu0 0
    %920 = vmatprep.subr.bf16.mxu0 0
    %921 = vmatpush1.bf16.msra.mxu0 0
    %922 = vmatprep.subr.bf16.mxu0 0
    %923 = vmatpush1.bf16.msra.mxu0 0
    %924 = vmatprep.subr.bf16.mxu0 0
    %925 = vmatpush1.bf16.msra.mxu0 0
    %926 = vmatprep.subr.bf16.mxu0 0
    %927 = vmatpush1.bf16.msra.mxu0 0
    %928 = vmatprep.subr.bf16.mxu0 0
    %929 = vmatpush1.bf16.msra.mxu0 0
    %930 = vmatprep.subr.bf16.mxu0 0
    %931 = vmatpush1.bf16.msra.mxu0 0
    %932 = vmatprep.subr.bf16.mxu0 0
    %933 = vmatpush1.bf16.msra.mxu0 0
    %934 = vmatprep.mubr.bf16.mxu0 0
    %935 = vmatmul.mubr.bf16.gmra.mrb[0].mxu0 %v900
    %v936 = vpop.f32.mrb[0].mxu0
    %v937 = vadd.f32 %v890, %v936
    %v938 = vpop.f32.mrb[0].mxu0
    %v939 = vpop.f32.mrb[0].mxu0
    %v940 = vadd.f32 %v890, %v939
    %v941 = vpop.f32.mrb[0].mxu0
    %942 = vdwg.mxu0
    %v943 = vmul.f32 %v937, %v937
    %v944 = vmul.f32 %v940, %v940
    %v945 = vmul.f32 %v937, %v943
    %v946 = vmul.f32 %v940, %v944
    %v947 = vmul.f32 %v945, 0.044715
    %v948 = vmul.f32 %v946, 0.044715
    %v949 = vadd.f32 %v937, %v947
    %v950 = vadd.f32 %v940, %v948
    %v951 = vmul.f32 %v949, 0.7978846
    %v952 = vmul.f32 %v950, 0.7978846
    %v953 = vtanh.pop %v951
    %v954 = vtanh.pop %v952
    %v955 = vadd.f32 %v953, 1.0
    %v956 = vadd.f32 %v954, 1.0
    %v957 = vmul.f32 %v955, 0.5
    %v958 = vmul.f32 %v956, 0.5
    %v959 = vmul.f32 %v937, %v957
    %v960 = vmul.f32 %v940, %v958
    %v961 = vpack.c.bf16 %v960, %v959
    %v962 = vlaneseq
    %v963 = vshrl.u32 %v962, 7
    %v964 = vsub.s32 7, %v963
    %v965 = vrot.slane %v25, %v964
    %966 = vrot.lane.b32.xlu0 %v895, 64
    %v967 = vpop.permute.xlu0 %966
    %968 = vrot.lane.b32.xlu0 %v896, 64
    %v969 = vpop.permute.xlu0 %968
    %vm970 = vcmask 523264
    %v972 = vsel %vm970, %v961, 0
    %v975 = vsel %vm970, %v967, 0
    %v978 = vsel %vm970, %v969, 0
    %980 = vmatprep.subr.bf16.mxu0 0
    %981 = vmatpush1.bf16.xpose.msra.mxu0 %v975
    %982 = vmatprep.subr.bf16.mxu0 0
    %983 = vmatpush1.bf16.xpose.msra.mxu0 %v978
    %984 = vmatprep.subr.bf16.mxu0 0
    %985 = vmatpush1.bf16.xpose.msra.mxu0 0
    %986 = vmatprep.subr.bf16.mxu0 0
    %987 = vmatpush1.bf16.xpose.msra.mxu0 0
    %988 = vmatprep.subr.bf16.mxu0 0
    %989 = vmatpush1.bf16.xpose.msra.mxu0 0
    %990 = vmatprep.subr.bf16.mxu0 0
    %991 = vmatpush1.bf16.xpose.msra.mxu0 0
    %992 = vmatprep.subr.bf16.mxu0 0
    %993 = vmatpush1.bf16.xpose.msra.mxu0 0
    %994 = vmatprep.subr.bf16.mxu0 0
    %995 = vmatpush1.bf16.xpose.msra.mxu0 0
    %996 = vmatprep.subr.bf16.mxu0 0
    %997 = vmatpush1.bf16.xpose.msra.mxu0 0
    %998 = vmatprep.subr.bf16.mxu0 0
    %999 = vmatpush1.bf16.xpose.msra.mxu0 0
    %1000 = vmatprep.subr.bf16.mxu0 0
    %1001 = vmatpush1.bf16.xpose.msra.mxu0 0
    %1002 = vmatprep.subr.bf16.mxu0 0
    %1003 = vmatpush1.bf16.xpose.msra.mxu0 0
    %1004 = vmatprep.subr.bf16.mxu0 0
    %1005 = vmatpush1.bf16.xpose.msra.mxu0 0
    %1006 = vmatprep.subr.bf16.mxu0 0
    %1007 = vmatpush1.bf16.xpose.msra.mxu0 0
    %1008 = vmatprep.subr.bf16.mxu0 0
    %1009 = vmatpush1.bf16.xpose.msra.mxu0 0
    %1010 = vmatprep.subr.bf16.mxu0 0
    %1011 = vmatpush1.bf16.xpose.msra.mxu0 0
    %1012 = vmatprep.mubr.bf16.mxu0 0
    %1013 = vmatmul.mubr.bf16.gmra.mrb[0].mxu0 %v972
    %v1014 = vpop.f32.mrb[0].mxu0
    %v1015 = vadd.f32 %v965, %v1014
    %v1016 = vpop.f32.mrb[0].mxu0
    %v1017 = vpop.f32.mrb[0].mxu0
    %v1018 = vadd.f32 %v965, %v1017
    %v1019 = vpop.f32.mrb[0].mxu0
    %1020 = vdwg.mxu0
    %v1021 = vadd.f32 %v884, %v1015
    %v1022 = vadd.f32 %v885, %v1018
    %v1023 = vsel %vm157, %v1021, 0.0
    %1024 = vadd.xlane.f32.xlu0 %v1023
    %v1025 = vpop.xlane.xlu0 %1024
    %v1026 = vsel %vm157, %v1022, 0.0
    %1027 = vadd.xlane.f32.xlu0 %v1026
    %v1028 = vpop.xlane.xlu0 %1027
    %v1029 = vmul.f32 %v1025, %v164
    %v1030 = vmul.f32 %v1028, %v164
    %v1031 = vsub.f32 %v1021, %v1029
    %v1032 = vsub.f32 %v1022, %v1030
    %v1033 = vmul.f32 %v1031, %v1031
    %v1034 = vmul.f32 %v1032, %v1032
    %v1035 = vsel %vm157, %v1033, 0.0
    %1036 = vadd.xlane.f32.xlu0 %v1035
    %v1037 = vpop.xlane.xlu0 %1036
    %v1038 = vsel %vm157, %v1034, 0.0
    %1039 = vadd.xlane.f32.xlu0 %v1038
    %v1040 = vpop.xlane.xlu0 %1039
    %v1041 = vmul.f32 %v1037, %v164
    %v1042 = vmul.f32 %v1040, %v164
    %v1043 = vadd.f32 %v1041, 1e-12
    %v1044 = vadd.f32 %v1042, 1e-12
    %v1045 = vrsqrt.pop %v1043
    %v1046 = vrsqrt.pop %v1044
    %v1047 = vmul.f32 %v1031, %v1045
    %v1048 = vmul.f32 %v1032, %v1046
    %v1049 = vlaneseq
    %v1050 = vshrl.u32 %v1049, 7
    %v1051 = vsub.s32 0, %v1050
    %v1052 = vrot.slane %v26, %v1051
    %v1053 = vmul.f32 %v1047, %v1052
    %v1054 = vmul.f32 %v1048, %v1052
    %v1055 = vlaneseq
    %v1056 = vshrl.u32 %v1055, 7
    %v1057 = vsub.s32 1, %v1056
    %v1058 = vrot.slane %v26, %v1057
    %v1059 = vadd.f32 %v1053, %v1058
    %v1060 = vadd.f32 %v1054, %v1058
    %1061 = vst.msk [vmem:[#allocation2] sm:$0xff] %vm157, %v1059
    %1062 = vst.msk [vmem:[#allocation2 + $0x8] sm:$0xff] %vm157, %v1060
    %v1063 = vpack.c.bf16 %v1060, %v1059
    %v1065 = vsel %vm157, %v1063, 0
    %1067 = vmatprep.subr.bf16.mxu0 0
    %1068 = vmatpush1.bf16.msra.mxu0 %v210
    %1069 = vmatprep.subr.bf16.mxu0 0
    %1070 = vmatpush1.bf16.msra.mxu0 %v211
    %1071 = vmatprep.subr.bf16.mxu0 0
    %1072 = vmatpush1.bf16.msra.mxu0 0
    %1073 = vmatprep.subr.bf16.mxu0 0
    %1074 = vmatpush1.bf16.msra.mxu0 0
    %1075 = vmatprep.subr.bf16.mxu0 0
    %1076 = vmatpush1.bf16.msra.mxu0 0
    %1077 = vmatprep.subr.bf16.mxu0 0
    %1078 = vmatpush1.bf16.msra.mxu0 0
    %1079 = vmatprep.subr.bf16.mxu0 0
    %1080 = vmatpush1.bf16.msra.mxu0 0
    %1081 = vmatprep.subr.bf16.mxu0 0
    %1082 = vmatpush1.bf16.msra.mxu0 0
    %1083 = vmatprep.subr.bf16.mxu0 0
    %1084 = vmatpush1.bf16.msra.mxu0 0
    %1085 = vmatprep.subr.bf16.mxu0 0
    %1086 = vmatpush1.bf16.msra.mxu0 0
    %1087 = vmatprep.subr.bf16.mxu0 0
    %1088 = vmatpush1.bf16.msra.mxu0 0
    %1089 = vmatprep.subr.bf16.mxu0 0
    %1090 = vmatpush1.bf16.msra.mxu0 0
    %1091 = vmatprep.subr.bf16.mxu0 0
    %1092 = vmatpush1.bf16.msra.mxu0 0
    %1093 = vmatprep.subr.bf16.mxu0 0
    %1094 = vmatpush1.bf16.msra.mxu0 0
    %1095 = vmatprep.subr.bf16.mxu0 0
    %1096 = vmatpush1.bf16.msra.mxu0 0
    %1097 = vmatprep.subr.bf16.mxu0 0
    %1098 = vmatpush1.bf16.msra.mxu0 0
    %1099 = vmatprep.mubr.bf16.mxu0 0
    %1100 = vmatmul.mubr.bf16.gmra.mrb[0].mxu0 %v1065
    %v1101 = vpop.f32.mrb[0].mxu0
    %v1102 = vadd.f32 %v201, %v1101
    %v1103 = vpop.f32.mrb[0].mxu0
    %v1104 = vpop.f32.mrb[0].mxu0
    %v1105 = vadd.f32 %v201, %v1104
    %v1106 = vpop.f32.mrb[0].mxu0
    %1107 = vdwg.mxu0
    %v1108 = vpack.c.bf16 %v1105, %v1102
    %1110 = vrot.lane.b32.xlu0 %v1108, 96
    %v1111 = vpop.permute.xlu0 %1110
    %v1113 = vsel %vm262, %v1108, 0
    %v1116 = vsel %vm262, %v1111, 0
    %1118 = vmatprep.subr.bf16.mxu0 0
    %1119 = vmatpush1.bf16.xpose.msra.mxu0 %v1116
    %1120 = vmatprep.subr.bf16.mxu0 0
    %1121 = vmatpush1.bf16.xpose.msra.mxu0 0
    %1122 = vmatprep.subr.bf16.mxu0 0
    %1123 = vmatpush1.bf16.xpose.msra.mxu0 0
    %1124 = vmatprep.subr.bf16.mxu0 0
    %1125 = vmatpush1.bf16.xpose.msra.mxu0 0
    %1126 = vmatprep.subr.bf16.mxu0 0
    %1127 = vmatpush1.bf16.xpose.msra.mxu0 0
    %1128 = vmatprep.subr.bf16.mxu0 0
    %1129 = vmatpush1.bf16.xpose.msra.mxu0 0
    %1130 = vmatprep.subr.bf16.mxu0 0
    %1131 = vmatpush1.bf16.xpose.msra.mxu0 0
    %1132 = vmatprep.subr.bf16.mxu0 0
    %1133 = vmatpush1.bf16.xpose.msra.mxu0 0
    %1134 = vmatprep.subr.bf16.mxu0 0
    %1135 = vmatpush1.bf16.xpose.msra.mxu0 0
    %1136 = vmatprep.subr.bf16.mxu0 0
    %1137 = vmatpush1.bf16.xpose.msra.mxu0 0
    %1138 = vmatprep.subr.bf16.mxu0 0
    %1139 = vmatpush1.bf16.xpose.msra.mxu0 0
    %1140 = vmatprep.subr.bf16.mxu0 0
    %1141 = vmatpush1.bf16.xpose.msra.mxu0 0
    %1142 = vmatprep.subr.bf16.mxu0 0
    %1143 = vmatpush1.bf16.xpose.msra.mxu0 0
    %1144 = vmatprep.subr.bf16.mxu0 0
    %1145 = vmatpush1.bf16.xpose.msra.mxu0 0
    %1146 = vmatprep.subr.bf16.mxu0 0
    %1147 = vmatpush1.bf16.xpose.msra.mxu0 0
    %1148 = vmatprep.subr.bf16.mxu0 0
    %1149 = vmatpush1.bf16.xpose.msra.mxu0 0
    %1150 = vmatprep.mubr.bf16.mxu0 0
    %1151 = vmatmul.mubr.bf16.gmra.mrb[0].mxu0 %v1113
    %v1152 = vpop.f32.mrb[0].mxu0
    %v1153 = vadd.f32 0.0, %v1152
    %v1154 = vpop.f32.mrb[0].mxu0
    %v1155 = vpop.f32.mrb[0].mxu0
    %v1156 = vadd.f32 0.0, %v1155
    %v1157 = vpop.f32.mrb[0].mxu0
    %1158 = vdwg.mxu0
    %v1159 = vmul.f32 %v1153, 0.35355338
    %v1160 = vmul.f32 %v1156, 0.35355338
    %v1161 = vadd.f32 %v1159, %v37
    %v1162 = vadd.f32 %v1160, %v38
    %v1163 = vsel %vm314, %v1161, -inf
    %1164 = vmax.xlane.f32.xlu0 %v1163
    %v1165 = vpop.xlane.xlu0 %1164
    %v1166 = vsel %vm314, %v1162, -inf
    %1167 = vmax.xlane.f32.xlu0 %v1166
    %v1168 = vpop.xlane.xlu0 %1167
    %v1169 = vsub.f32 %v1161, %v1165
    %v1170 = vsub.f32 %v1162, %v1168
    %v1171 = vmul.f32 %v1169, 1.442695
    %v1172 = vpow.pop %v1171
    %v1173 = vmul.f32 %v1170, 1.442695
    %v1174 = vpow.pop %v1173
    %v1175 = vsel %vm314, %v1172, 0.0
    %1176 = vadd.xlane.f32.xlu0 %v1175
    %v1177 = vpop.xlane.xlu0 %1176
    %v1178 = vsel %vm314, %v1174, 0.0
    %1179 = vadd.xlane.f32.xlu0 %v1178
    %v1180 = vpop.xlane.xlu0 %1179
    %v1181 = vrcp.pop %v1177
    %v1182 = vrcp.pop %v1180
    %v1183 = vmul.f32 %v1172, %v1181
    %v1184 = vmul.f32 %v1174, %v1182
    %v1185 = vpack.c.bf16 %v1184, %v1183
    %1186 = vrot.lane.b32.xlu0 %v1108, 64
    %v1187 = vpop.permute.xlu0 %1186
    %v1190 = vsel %vm314, %v1185, 0
    %1192 = vmatprep.subr.bf16.mxu0 0
    %1193 = vmatpush1.bf16.msra.mxu0 %v1187
    %1194 = vmatprep.subr.bf16.mxu0 0
    %1195 = vmatpush1.bf16.msra.mxu0 0
    %1196 = vmatprep.subr.bf16.mxu0 0
    %1197 = vmatpush1.bf16.msra.mxu0 0
    %1198 = vmatprep.subr.bf16.mxu0 0
    %1199 = vmatpush1.bf16.msra.mxu0 0
    %1200 = vmatprep.subr.bf16.mxu0 0
    %1201 = vmatpush1.bf16.msra.mxu0 0
    %1202 = vmatprep.subr.bf16.mxu0 0
    %1203 = vmatpush1.bf16.msra.mxu0 0
    %1204 = vmatprep.subr.bf16.mxu0 0
    %1205 = vmatpush1.bf16.msra.mxu0 0
    %1206 = vmatprep.subr.bf16.mxu0 0
    %1207 = vmatpush1.bf16.msra.mxu0 0
    %1208 = vmatprep.subr.bf16.mxu0 0
    %1209 = vmatpush1.bf16.msra.mxu0 0
    %1210 = vmatprep.subr.bf16.mxu0 0
    %1211 = vmatpush1.bf16.msra.mxu0 0
    %1212 = vmatprep.subr.bf16.mxu0 0
    %1213 = vmatpush1.bf16.msra.mxu0 0
    %1214 = vmatprep.subr.bf16.mxu0 0
    %1215 = vmatpush1.bf16.msra.mxu0 0
    %1216 = vmatprep.subr.bf16.mxu0 0
    %1217 = vmatpush1.bf16.msra.mxu0 0
    %1218 = vmatprep.subr.bf16.mxu0 0
    %1219 = vmatpush1.bf16.msra.mxu0 0
    %1220 = vmatprep.subr.bf16.mxu0 0
    %1221 = vmatpush1.bf16.msra.mxu0 0
    %1222 = vmatprep.subr.bf16.mxu0 0
    %1223 = vmatpush1.bf16.msra.mxu0 0
    %1224 = vmatprep.mubr.bf16.mxu0 0
    %1225 = vmatmul.mubr.bf16.gmra.mrb[0].mxu0 %v1190
    %v1226 = vpop.f32.mrb[0].mxu0
    %v1227 = vadd.f32 0.0, %v1226
    %v1228 = vpop.f32.mrb[0].mxu0
    %v1229 = vpop.f32.mrb[0].mxu0
    %v1230 = vadd.f32 0.0, %v1229
    %v1231 = vpop.f32.mrb[0].mxu0
    %1232 = vdwg.mxu0
    %1233 = vrot.lane.b32.xlu0 %v1108, 120
    %v1234 = vpop.permute.xlu0 %1233
    %1235 = vrot.lane.b32.xlu0 %v1108, 88
    %v1236 = vpop.permute.xlu0 %1235
    %v1238 = vsel %vm262, %v1234, 0
    %v1241 = vsel %vm262, %v1236, 0
    %1243 = vmatprep.subr.bf16.mxu0 0
    %1244 = vmatpush1.bf16.xpose.msra.mxu0 %v1241
    %1245 = vmatprep.subr.bf16.mxu0 0
    %1246 = vmatpush1.bf16.xpose.msra.mxu0 0
    %1247 = vmatprep.subr.bf16.mxu0 0
    %1248 = vmatpush1.bf16.xpose.msra.mxu0 0
    %1249 = vmatprep.subr.bf16.mxu0 0
    %1250 = vmatpush1.bf16.xpose.msra.mxu0 0
    %1251 = vmatprep.subr.bf16.mxu0 0
    %1252 = vmatpush1.bf16.xpose.msra.mxu0 0
    %1253 = vmatprep.subr.bf16.mxu0 0
    %1254 = vmatpush1.bf16.xpose.msra.mxu0 0
    %1255 = vmatprep.subr.bf16.mxu0 0
    %1256 = vmatpush1.bf16.xpose.msra.mxu0 0
    %1257 = vmatprep.subr.bf16.mxu0 0
    %1258 = vmatpush1.bf16.xpose.msra.mxu0 0
    %1259 = vmatprep.subr.bf16.mxu0 0
    %1260 = vmatpush1.bf16.xpose.msra.mxu0 0
    %1261 = vmatprep.subr.bf16.mxu0 0
    %1262 = vmatpush1.bf16.xpose.msra.mxu0 0
    %1263 = vmatprep.subr.bf16.mxu0 0
    %1264 = vmatpush1.bf16.xpose.msra.mxu0 0
    %1265 = vmatprep.subr.bf16.mxu0 0
    %1266 = vmatpush1.bf16.xpose.msra.mxu0 0
    %1267 = vmatprep.subr.bf16.mxu0 0
    %1268 = vmatpush1.bf16.xpose.msra.mxu0 0
    %1269 = vmatprep.subr.bf16.mxu0 0
    %1270 = vmatpush1.bf16.xpose.msra.mxu0 0
    %1271 = vmatprep.subr.bf16.mxu0 0
    %1272 = vmatpush1.bf16.xpose.msra.mxu0 0
    %1273 = vmatprep.subr.bf16.mxu0 0
    %1274 = vmatpush1.bf16.xpose.msra.mxu0 0
    %1275 = vmatprep.mubr.bf16.mxu0 0
    %1276 = vmatmul.mubr.bf16.gmra.mrb[0].mxu0 %v1238
    %v1277 = vpop.f32.mrb[0].mxu0
    %v1278 = vadd.f32 0.0, %v1277
    %v1279 = vpop.f32.mrb[0].mxu0
    %v1280 = vpop.f32.mrb[0].mxu0
    %v1281 = vadd.f32 0.0, %v1280
    %v1282 = vpop.f32.mrb[0].mxu0
    %1283 = vdwg.mxu0
    %v1284 = vmul.f32 %v1278, 0.35355338
    %v1285 = vmul.f32 %v1281, 0.35355338
    %v1286 = vadd.f32 %v1284, %v37
    %v1287 = vadd.f32 %v1285, %v38
    %v1288 = vsel %vm314, %v1286, -inf
    %1289 = vmax.xlane.f32.xlu0 %v1288
    %v1290 = vpop.xlane.xlu0 %1289
    %v1291 = vsel %vm314, %v1287, -inf
    %1292 = vmax.xlane.f32.xlu0 %v1291
    %v1293 = vpop.xlane.xlu0 %1292
    %v1294 = vsub.f32 %v1286, %v1290
    %v1295 = vsub.f32 %v1287, %v1293
    %v1296 = vmul.f32 %v1294, 1.442695
    %v1297 = vpow.pop %v1296
    %v1298 = vmul.f32 %v1295, 1.442695
    %v1299 = vpow.pop %v1298
    %v1300 = vsel %vm314, %v1297, 0.0
    %1301 = vadd.xlane.f32.xlu0 %v1300
    %v1302 = vpop.xlane.xlu0 %1301
    %v1303 = vsel %vm314, %v1299, 0.0
    %1304 = vadd.xlane.f32.xlu0 %v1303
    %v1305 = vpop.xlane.xlu0 %1304
    %v1306 = vrcp.pop %v1302
    %v1307 = vrcp.pop %v1305
    %v1308 = vmul.f32 %v1297, %v1306
    %v1309 = vmul.f32 %v1299, %v1307
    %v1310 = vpack.c.bf16 %v1309, %v1308
    %1311 = vrot.lane.b32.xlu0 %v1108, 56
    %v1312 = vpop.permute.xlu0 %1311
    %v1315 = vsel %vm314, %v1310, 0
    %1317 = vmatprep.subr.bf16.mxu0 0
    %1318 = vmatpush1.bf16.msra.mxu0 %v1312
    %1319 = vmatprep.subr.bf16.mxu0 0
    %1320 = vmatpush1.bf16.msra.mxu0 0
    %1321 = vmatprep.subr.bf16.mxu0 0
    %1322 = vmatpush1.bf16.msra.mxu0 0
    %1323 = vmatprep.subr.bf16.mxu0 0
    %1324 = vmatpush1.bf16.msra.mxu0 0
    %1325 = vmatprep.subr.bf16.mxu0 0
    %1326 = vmatpush1.bf16.msra.mxu0 0
    %1327 = vmatprep.subr.bf16.mxu0 0
    %1328 = vmatpush1.bf16.msra.mxu0 0
    %1329 = vmatprep.subr.bf16.mxu0 0
    %1330 = vmatpush1.bf16.msra.mxu0 0
    %1331 = vmatprep.subr.bf16.mxu0 0
    %1332 = vmatpush1.bf16.msra.mxu0 0
    %1333 = vmatprep.subr.bf16.mxu0 0
    %1334 = vmatpush1.bf16.msra.mxu0 0
    %1335 = vmatprep.subr.bf16.mxu0 0
    %1336 = vmatpush1.bf16.msra.mxu0 0
    %1337 = vmatprep.subr.bf16.mxu0 0
    %1338 = vmatpush1.bf16.msra.mxu0 0
    %1339 = vmatprep.subr.bf16.mxu0 0
    %1340 = vmatpush1.bf16.msra.mxu0 0
    %1341 = vmatprep.subr.bf16.mxu0 0
    %1342 = vmatpush1.bf16.msra.mxu0 0
    %1343 = vmatprep.subr.bf16.mxu0 0
    %1344 = vmatpush1.bf16.msra.mxu0 0
    %1345 = vmatprep.subr.bf16.mxu0 0
    %1346 = vmatpush1.bf16.msra.mxu0 0
    %1347 = vmatprep.subr.bf16.mxu0 0
    %1348 = vmatpush1.bf16.msra.mxu0 0
    %1349 = vmatprep.mubr.bf16.mxu0 0
    %1350 = vmatmul.mubr.bf16.gmra.mrb[0].mxu0 %v1315
    %v1351 = vpop.f32.mrb[0].mxu0
    %v1352 = vadd.f32 0.0, %v1351
    %v1353 = vpop.f32.mrb[0].mxu0
    %v1354 = vpop.f32.mrb[0].mxu0
    %v1355 = vadd.f32 0.0, %v1354
    %v1356 = vpop.f32.mrb[0].mxu0
    %1357 = vdwg.mxu0
    %1358 = vrot.lane.b32.xlu0 %v1108, 112
    %v1359 = vpop.permute.xlu0 %1358
    %1360 = vrot.lane.b32.xlu0 %v1108, 80
    %v1361 = vpop.permute.xlu0 %1360
    %v1363 = vsel %vm262, %v1359, 0
    %v1366 = vsel %vm262, %v1361, 0
    %1368 = vmatprep.subr.bf16.mxu0 0
    %1369 = vmatpush1.bf16.xpose.msra.mxu0 %v1366
    %1370 = vmatprep.subr.bf16.mxu0 0
    %1371 = vmatpush1.bf16.xpose.msra.mxu0 0
    %1372 = vmatprep.subr.bf16.mxu0 0
    %1373 = vmatpush1.bf16.xpose.msra.mxu0 0
    %1374 = vmatprep.subr.bf16.mxu0 0
    %1375 = vmatpush1.bf16.xpose.msra.mxu0 0
    %1376 = vmatprep.subr.bf16.mxu0 0
    %1377 = vmatpush1.bf16.xpose.msra.mxu0 0
    %1378 = vmatprep.subr.bf16.mxu0 0
    %1379 = vmatpush1.bf16.xpose.msra.mxu0 0
    %1380 = vmatprep.subr.bf16.mxu0 0
    %1381 = vmatpush1.bf16.xpose.msra.mxu0 0
    %1382 = vmatprep.subr.bf16.mxu0 0
    %1383 = vmatpush1.bf16.xpose.msra.mxu0 0
    %1384 = vmatprep.subr.bf16.mxu0 0
    %1385 = vmatpush1.bf16.xpose.msra.mxu0 0
    %1386 = vmatprep.subr.bf16.mxu0 0
    %1387 = vmatpush1.bf16.xpose.msra.mxu0 0
    %1388 = vmatprep.subr.bf16.mxu0 0
    %1389 = vmatpush1.bf16.xpose.msra.mxu0 0
    %1390 = vmatprep.subr.bf16.mxu0 0
    %1391 = vmatpush1.bf16.xpose.msra.mxu0 0
    %1392 = vmatprep.subr.bf16.mxu0 0
    %1393 = vmatpush1.bf16.xpose.msra.mxu0 0
    %1394 = vmatprep.subr.bf16.mxu0 0
    %1395 = vmatpush1.bf16.xpose.msra.mxu0 0
    %1396 = vmatprep.subr.bf16.mxu0 0
    %1397 = vmatpush1.bf16.xpose.msra.mxu0 0
    %1398 = vmatprep.subr.bf16.mxu0 0
    %1399 = vmatpush1.bf16.xpose.msra.mxu0 0
    %1400 = vmatprep.mubr.bf16.mxu0 0
    %1401 = vmatmul.mubr.bf16.gmra.mrb[0].mxu0 %v1363
    %v1402 = vpop.f32.mrb[0].mxu0
    %v1403 = vadd.f32 0.0, %v1402
    %v1404 = vpop.f32.mrb[0].mxu0
    %v1405 = vpop.f32.mrb[0].mxu0
    %v1406 = vadd.f32 0.0, %v1405
    %v1407 = vpop.f32.mrb[0].mxu0
    %1408 = vdwg.mxu0
    %v1409 = vmul.f32 %v1403, 0.35355338
    %v1410 = vmul.f32 %v1406, 0.35355338
    %v1411 = vadd.f32 %v1409, %v37
    %v1412 = vadd.f32 %v1410, %v38
    %v1413 = vsel %vm314, %v1411, -inf
    %1414 = vmax.xlane.f32.xlu0 %v1413
    %v1415 = vpop.xlane.xlu0 %1414
    %v1416 = vsel %vm314, %v1412, -inf
    %1417 = vmax.xlane.f32.xlu0 %v1416
    %v1418 = vpop.xlane.xlu0 %1417
    %v1419 = vsub.f32 %v1411, %v1415
    %v1420 = vsub.f32 %v1412, %v1418
    %v1421 = vmul.f32 %v1419, 1.442695
    %v1422 = vpow.pop %v1421
    %v1423 = vmul.f32 %v1420, 1.442695
    %v1424 = vpow.pop %v1423
    %v1425 = vsel %vm314, %v1422, 0.0
    %1426 = vadd.xlane.f32.xlu0 %v1425
    %v1427 = vpop.xlane.xlu0 %1426
    %v1428 = vsel %vm314, %v1424, 0.0
    %1429 = vadd.xlane.f32.xlu0 %v1428
    %v1430 = vpop.xlane.xlu0 %1429
    %v1431 = vrcp.pop %v1427
    %v1432 = vrcp.pop %v1430
    %v1433 = vmul.f32 %v1422, %v1431
    %v1434 = vmul.f32 %v1424, %v1432
    %v1435 = vpack.c.bf16 %v1434, %v1433
    %1436 = vrot.lane.b32.xlu0 %v1108, 48
    %v1437 = vpop.permute.xlu0 %1436
    %v1440 = vsel %vm314, %v1435, 0
    %1442 = vmatprep.subr.bf16.mxu0 0
    %1443 = vmatpush1.bf16.msra.mxu0 %v1437
    %1444 = vmatprep.subr.bf16.mxu0 0
    %1445 = vmatpush1.bf16.msra.mxu0 0
    %1446 = vmatprep.subr.bf16.mxu0 0
    %1447 = vmatpush1.bf16.msra.mxu0 0
    %1448 = vmatprep.subr.bf16.mxu0 0
    %1449 = vmatpush1.bf16.msra.mxu0 0
    %1450 = vmatprep.subr.bf16.mxu0 0
    %1451 = vmatpush1.bf16.msra.mxu0 0
    %1452 = vmatprep.subr.bf16.mxu0 0
    %1453 = vmatpush1.bf16.msra.mxu0 0
    %1454 = vmatprep.subr.bf16.mxu0 0
    %1455 = vmatpush1.bf16.msra.mxu0 0
    %1456 = vmatprep.subr.bf16.mxu0 0
    %1457 = vmatpush1.bf16.msra.mxu0 0
    %1458 = vmatprep.subr.bf16.mxu0 0
    %1459 = vmatpush1.bf16.msra.mxu0 0
    %1460 = vmatprep.subr.bf16.mxu0 0
    %1461 = vmatpush1.bf16.msra.mxu0 0
    %1462 = vmatprep.subr.bf16.mxu0 0
    %1463 = vmatpush1.bf16.msra.mxu0 0
    %1464 = vmatprep.subr.bf16.mxu0 0
    %1465 = vmatpush1.bf16.msra.mxu0 0
    %1466 = vmatprep.subr.bf16.mxu0 0
    %1467 = vmatpush1.bf16.msra.mxu0 0
    %1468 = vmatprep.subr.bf16.mxu0 0
    %1469 = vmatpush1.bf16.msra.mxu0 0
    %1470 = vmatprep.subr.bf16.mxu0 0
    %1471 = vmatpush1.bf16.msra.mxu0 0
    %1472 = vmatprep.subr.bf16.mxu0 0
    %1473 = vmatpush1.bf16.msra.mxu0 0
    %1474 = vmatprep.mubr.bf16.mxu0 0
    %1475 = vmatmul.mubr.bf16.gmra.mrb[0].mxu0 %v1440
    %v1476 = vpop.f32.mrb[0].mxu0
    %v1477 = vadd.f32 0.0, %v1476
    %v1478 = vpop.f32.mrb[0].mxu0
    %v1479 = vpop.f32.mrb[0].mxu0
    %v1480 = vadd.f32 0.0, %v1479
    %v1481 = vpop.f32.mrb[0].mxu0
    %1482 = vdwg.mxu0
    %1483 = vrot.lane.b32.xlu0 %v1108, 104
    %v1484 = vpop.permute.xlu0 %1483
    %1485 = vrot.lane.b32.xlu0 %v1108, 72
    %v1486 = vpop.permute.xlu0 %1485
    %v1488 = vsel %vm262, %v1484, 0
    %v1491 = vsel %vm262, %v1486, 0
    %1493 = vmatprep.subr.bf16.mxu0 0
    %1494 = vmatpush1.bf16.xpose.msra.mxu0 %v1491
    %1495 = vmatprep.subr.bf16.mxu0 0
    %1496 = vmatpush1.bf16.xpose.msra.mxu0 0
    %1497 = vmatprep.subr.bf16.mxu0 0
    %1498 = vmatpush1.bf16.xpose.msra.mxu0 0
    %1499 = vmatprep.subr.bf16.mxu0 0
    %1500 = vmatpush1.bf16.xpose.msra.mxu0 0
    %1501 = vmatprep.subr.bf16.mxu0 0
    %1502 = vmatpush1.bf16.xpose.msra.mxu0 0
    %1503 = vmatprep.subr.bf16.mxu0 0
    %1504 = vmatpush1.bf16.xpose.msra.mxu0 0
    %1505 = vmatprep.subr.bf16.mxu0 0
    %1506 = vmatpush1.bf16.xpose.msra.mxu0 0
    %1507 = vmatprep.subr.bf16.mxu0 0
    %1508 = vmatpush1.bf16.xpose.msra.mxu0 0
    %1509 = vmatprep.subr.bf16.mxu0 0
    %1510 = vmatpush1.bf16.xpose.msra.mxu0 0
    %1511 = vmatprep.subr.bf16.mxu0 0
    %1512 = vmatpush1.bf16.xpose.msra.mxu0 0
    %1513 = vmatprep.subr.bf16.mxu0 0
    %1514 = vmatpush1.bf16.xpose.msra.mxu0 0
    %1515 = vmatprep.subr.bf16.mxu0 0
    %1516 = vmatpush1.bf16.xpose.msra.mxu0 0
    %1517 = vmatprep.subr.bf16.mxu0 0
    %1518 = vmatpush1.bf16.xpose.msra.mxu0 0
    %1519 = vmatprep.subr.bf16.mxu0 0
    %1520 = vmatpush1.bf16.xpose.msra.mxu0 0
    %1521 = vmatprep.subr.bf16.mxu0 0
    %1522 = vmatpush1.bf16.xpose.msra.mxu0 0
    %1523 = vmatprep.subr.bf16.mxu0 0
    %1524 = vmatpush1.bf16.xpose.msra.mxu0 0
    %1525 = vmatprep.mubr.bf16.mxu0 0
    %1526 = vmatmul.mubr.bf16.gmra.mrb[0].mxu0 %v1488
    %v1527 = vpop.f32.mrb[0].mxu0
    %v1528 = vadd.f32 0.0, %v1527
    %v1529 = vpop.f32.mrb[0].mxu0
    %v1530 = vpop.f32.mrb[0].mxu0
    %v1531 = vadd.f32 0.0, %v1530
    %v1532 = vpop.f32.mrb[0].mxu0
    %1533 = vdwg.mxu0
    %v1534 = vmul.f32 %v1528, 0.35355338
    %v1535 = vmul.f32 %v1531, 0.35355338
    %v1536 = vadd.f32 %v1534, %v37
    %v1537 = vadd.f32 %v1535, %v38
    %v1538 = vsel %vm314, %v1536, -inf
    %1539 = vmax.xlane.f32.xlu0 %v1538
    %v1540 = vpop.xlane.xlu0 %1539
    %v1541 = vsel %vm314, %v1537, -inf
    %1542 = vmax.xlane.f32.xlu0 %v1541
    %v1543 = vpop.xlane.xlu0 %1542
    %v1544 = vsub.f32 %v1536, %v1540
    %v1545 = vsub.f32 %v1537, %v1543
    %v1546 = vmul.f32 %v1544, 1.442695
    %v1547 = vpow.pop %v1546
    %v1548 = vmul.f32 %v1545, 1.442695
    %v1549 = vpow.pop %v1548
    %v1550 = vsel %vm314, %v1547, 0.0
    %1551 = vadd.xlane.f32.xlu0 %v1550
    %v1552 = vpop.xlane.xlu0 %1551
    %v1553 = vsel %vm314, %v1549, 0.0
    %1554 = vadd.xlane.f32.xlu0 %v1553
    %v1555 = vpop.xlane.xlu0 %1554
    %v1556 = vrcp.pop %v1552
    %v1557 = vrcp.pop %v1555
    %v1558 = vmul.f32 %v1547, %v1556
    %v1559 = vmul.f32 %v1549, %v1557
    %v1560 = vpack.c.bf16 %v1559, %v1558
    %1561 = vrot.lane.b32.xlu0 %v1108, 40
    %v1562 = vpop.permute.xlu0 %1561
    %v1565 = vsel %vm314, %v1560, 0
    %1567 = vmatprep.subr.bf16.mxu0 0
    %1568 = vmatpush1.bf16.msra.mxu0 %v1562
    %1569 = vmatprep.subr.bf16.mxu0 0
    %1570 = vmatpush1.bf16.msra.mxu0 0
    %1571 = vmatprep.subr.bf16.mxu0 0
    %1572 = vmatpush1.bf16.msra.mxu0 0
    %1573 = vmatprep.subr.bf16.mxu0 0
    %1574 = vmatpush1.bf16.msra.mxu0 0
    %1575 = vmatprep.subr.bf16.mxu0 0
    %1576 = vmatpush1.bf16.msra.mxu0 0
    %1577 = vmatprep.subr.bf16.mxu0 0
    %1578 = vmatpush1.bf16.msra.mxu0 0
    %1579 = vmatprep.subr.bf16.mxu0 0
    %1580 = vmatpush1.bf16.msra.mxu0 0
    %1581 = vmatprep.subr.bf16.mxu0 0
    %1582 = vmatpush1.bf16.msra.mxu0 0
    %1583 = vmatprep.subr.bf16.mxu0 0
    %1584 = vmatpush1.bf16.msra.mxu0 0
    %1585 = vmatprep.subr.bf16.mxu0 0
    %1586 = vmatpush1.bf16.msra.mxu0 0
    %1587 = vmatprep.subr.bf16.mxu0 0
    %1588 = vmatpush1.bf16.msra.mxu0 0
    %1589 = vmatprep.subr.bf16.mxu0 0
    %1590 = vmatpush1.bf16.msra.mxu0 0
    %1591 = vmatprep.subr.bf16.mxu0 0
    %1592 = vmatpush1.bf16.msra.mxu0 0
    %1593 = vmatprep.subr.bf16.mxu0 0
    %1594 = vmatpush1.bf16.msra.mxu0 0
    %1595 = vmatprep.subr.bf16.mxu0 0
    %1596 = vmatpush1.bf16.msra.mxu0 0
    %1597 = vmatprep.subr.bf16.mxu0 0
    %1598 = vmatpush1.bf16.msra.mxu0 0
    %1599 = vmatprep.mubr.bf16.mxu0 0
    %1600 = vmatmul.mubr.bf16.gmra.mrb[0].mxu0 %v1565
    %v1601 = vpop.f32.mrb[0].mxu0
    %v1602 = vadd.f32 0.0, %v1601
    %v1603 = vpop.f32.mrb[0].mxu0
    %v1604 = vpop.f32.mrb[0].mxu0
    %v1605 = vadd.f32 0.0, %v1604
    %v1606 = vpop.f32.mrb[0].mxu0
    %1607 = vdwg.mxu0
    %1610 = vrot.lane.b32.xlu0 %v1352, 8
    %v1611 = vpop.permute.xlu0 %1610
    %1612 = vrot.lane.b32.xlu0 %v1355, 8
    %v1613 = vpop.permute.xlu0 %1612
    %1618 = vrot.lane.b32.xlu0 %v1477, 16
    %v1619 = vpop.permute.xlu0 %1618
    %1620 = vrot.lane.b32.xlu0 %v1480, 16
    %v1621 = vpop.permute.xlu0 %1620
    %1626 = vrot.lane.b32.xlu0 %v1602, 24
    %v1627 = vpop.permute.xlu0 %1626
    %1628 = vrot.lane.b32.xlu0 %v1605, 24
    %v1629 = vpop.permute.xlu0 %1628
    %v1632 = vsel %vm262, %v1227, %v1611
    %v1633 = vsel %vm262, %v1230, %v1613
    %v1634 = vsel %vm314, %v1632, %v1619
    %v1635 = vsel %vm314, %v1633, %v1621
    %v1636 = vsel %vm788, %v1634, %v1627
    %v1637 = vsel %vm788, %v1635, %v1629
    %v1638 = vpack.c.bf16 %v1637, %v1636
    %v1640 = vsel %vm157, %v1638, 0
    %1642 = vmatprep.subr.bf16.mxu0 0
    %1643 = vmatpush1.bf16.msra.mxu0 %v797
    %1644 = vmatprep.subr.bf16.mxu0 0
    %1645 = vmatpush1.bf16.msra.mxu0 %v799
    %1646 = vmatprep.subr.bf16.mxu0 0
    %1647 = vmatpush1.bf16.msra.mxu0 0
    %1648 = vmatprep.subr.bf16.mxu0 0
    %1649 = vmatpush1.bf16.msra.mxu0 0
    %1650 = vmatprep.subr.bf16.mxu0 0
    %1651 = vmatpush1.bf16.msra.mxu0 0
    %1652 = vmatprep.subr.bf16.mxu0 0
    %1653 = vmatpush1.bf16.msra.mxu0 0
    %1654 = vmatprep.subr.bf16.mxu0 0
    %1655 = vmatpush1.bf16.msra.mxu0 0
    %1656 = vmatprep.subr.bf16.mxu0 0
    %1657 = vmatpush1.bf16.msra.mxu0 0
    %1658 = vmatprep.subr.bf16.mxu0 0
    %1659 = vmatpush1.bf16.msra.mxu0 0
    %1660 = vmatprep.subr.bf16.mxu0 0
    %1661 = vmatpush1.bf16.msra.mxu0 0
    %1662 = vmatprep.subr.bf16.mxu0 0
    %1663 = vmatpush1.bf16.msra.mxu0 0
    %1664 = vmatprep.subr.bf16.mxu0 0
    %1665 = vmatpush1.bf16.msra.mxu0 0
    %1666 = vmatprep.subr.bf16.mxu0 0
    %1667 = vmatpush1.bf16.msra.mxu0 0
    %1668 = vmatprep.subr.bf16.mxu0 0
    %1669 = vmatpush1.bf16.msra.mxu0 0
    %1670 = vmatprep.subr.bf16.mxu0 0
    %1671 = vmatpush1.bf16.msra.mxu0 0
    %1672 = vmatprep.subr.bf16.mxu0 0
    %1673 = vmatpush1.bf16.msra.mxu0 0
    %1674 = vmatprep.mubr.bf16.mxu0 0
    %1675 = vmatmul.mubr.bf16.gmra.mrb[0].mxu0 %v1640
    %v1676 = vpop.f32.mrb[0].mxu0
    %v1677 = vadd.f32 %v795, %v1676
    %v1678 = vpop.f32.mrb[0].mxu0
    %v1679 = vpop.f32.mrb[0].mxu0
    %v1680 = vadd.f32 %v795, %v1679
    %v1681 = vpop.f32.mrb[0].mxu0
    %1682 = vdwg.mxu0
    %v1683 = vadd.f32 %v1059, %v1677
    %v1684 = vadd.f32 %v1060, %v1680
    %v1685 = vsel %vm157, %v1683, 0.0
    %1686 = vadd.xlane.f32.xlu0 %v1685
    %v1687 = vpop.xlane.xlu0 %1686
    %v1688 = vsel %vm157, %v1684, 0.0
    %1689 = vadd.xlane.f32.xlu0 %v1688
    %v1690 = vpop.xlane.xlu0 %1689
    %v1691 = vmul.f32 %v1687, %v164
    %v1692 = vmul.f32 %v1690, %v164
    %v1693 = vsub.f32 %v1683, %v1691
    %v1694 = vsub.f32 %v1684, %v1692
    %v1695 = vmul.f32 %v1693, %v1693
    %v1696 = vmul.f32 %v1694, %v1694
    %v1697 = vsel %vm157, %v1695, 0.0
    %1698 = vadd.xlane.f32.xlu0 %v1697
    %v1699 = vpop.xlane.xlu0 %1698
    %v1700 = vsel %vm157, %v1696, 0.0
    %1701 = vadd.xlane.f32.xlu0 %v1700
    %v1702 = vpop.xlane.xlu0 %1701
    %v1703 = vmul.f32 %v1699, %v164
    %v1704 = vmul.f32 %v1702, %v164
    %v1705 = vadd.f32 %v1703, 1e-12
    %v1706 = vadd.f32 %v1704, 1e-12
    %v1707 = vrsqrt.pop %v1705
    %v1708 = vrsqrt.pop %v1706
    %v1709 = vmul.f32 %v1693, %v1707
    %v1710 = vmul.f32 %v1694, %v1708
    %v1711 = vmul.f32 %v1709, %v877
    %v1712 = vmul.f32 %v1710, %v877
    %v1713 = vadd.f32 %v1711, %v883
    %v1714 = vadd.f32 %v1712, %v883
    %v1715 = vpack.c.bf16 %v1714, %v1713
    %v1717 = vsel %vm157, %v1715, 0
    %1719 = vmatprep.subr.bf16.mxu0 0
    %1720 = vmatpush1.bf16.msra.mxu0 %v895
    %1721 = vmatprep.subr.bf16.mxu0 0
    %1722 = vmatpush1.bf16.msra.mxu0 %v896
    %1723 = vmatprep.subr.bf16.mxu0 0
    %1724 = vmatpush1.bf16.msra.mxu0 0
    %1725 = vmatprep.subr.bf16.mxu0 0
    %1726 = vmatpush1.bf16.msra.mxu0 0
    %1727 = vmatprep.subr.bf16.mxu0 0
    %1728 = vmatpush1.bf16.msra.mxu0 0
    %1729 = vmatprep.subr.bf16.mxu0 0
    %1730 = vmatpush1.bf16.msra.mxu0 0
    %1731 = vmatprep.subr.bf16.mxu0 0
    %1732 = vmatpush1.bf16.msra.mxu0 0
    %1733 = vmatprep.subr.bf16.mxu0 0
    %1734 = vmatpush1.bf16.msra.mxu0 0
    %1735 = vmatprep.subr.bf16.mxu0 0
    %1736 = vmatpush1.bf16.msra.mxu0 0
    %1737 = vmatprep.subr.bf16.mxu0 0
    %1738 = vmatpush1.bf16.msra.mxu0 0
    %1739 = vmatprep.subr.bf16.mxu0 0
    %1740 = vmatpush1.bf16.msra.mxu0 0
    %1741 = vmatprep.subr.bf16.mxu0 0
    %1742 = vmatpush1.bf16.msra.mxu0 0
    %1743 = vmatprep.subr.bf16.mxu0 0
    %1744 = vmatpush1.bf16.msra.mxu0 0
    %1745 = vmatprep.subr.bf16.mxu0 0
    %1746 = vmatpush1.bf16.msra.mxu0 0
    %1747 = vmatprep.subr.bf16.mxu0 0
    %1748 = vmatpush1.bf16.msra.mxu0 0
    %1749 = vmatprep.subr.bf16.mxu0 0
    %1750 = vmatpush1.bf16.msra.mxu0 0
    %1751 = vmatprep.mubr.bf16.mxu0 0
    %1752 = vmatmul.mubr.bf16.gmra.mrb[0].mxu0 %v1717
    %v1753 = vpop.f32.mrb[0].mxu0
    %v1754 = vadd.f32 %v890, %v1753
    %v1755 = vpop.f32.mrb[0].mxu0
    %v1756 = vpop.f32.mrb[0].mxu0
    %v1757 = vadd.f32 %v890, %v1756
    %v1758 = vpop.f32.mrb[0].mxu0
    %1759 = vdwg.mxu0
    %v1760 = vmul.f32 %v1754, %v1754
    %v1761 = vmul.f32 %v1757, %v1757
    %v1762 = vmul.f32 %v1754, %v1760
    %v1763 = vmul.f32 %v1757, %v1761
    %v1764 = vmul.f32 %v1762, 0.044715
    %v1765 = vmul.f32 %v1763, 0.044715
    %v1766 = vadd.f32 %v1754, %v1764
    %v1767 = vadd.f32 %v1757, %v1765
    %v1768 = vmul.f32 %v1766, 0.7978846
    %v1769 = vmul.f32 %v1767, 0.7978846
    %v1770 = vtanh.pop %v1768
    %v1771 = vtanh.pop %v1769
    %v1772 = vadd.f32 %v1770, 1.0
    %v1773 = vadd.f32 %v1771, 1.0
    %v1774 = vmul.f32 %v1772, 0.5
    %v1775 = vmul.f32 %v1773, 0.5
    %v1776 = vmul.f32 %v1754, %v1774
    %v1777 = vmul.f32 %v1757, %v1775
    %v1778 = vpack.c.bf16 %v1777, %v1776
    %v1780 = vsel %vm970, %v1778, 0
    %1782 = vmatprep.subr.bf16.mxu0 0
    %1783 = vmatpush1.bf16.xpose.msra.mxu0 %v975
    %1784 = vmatprep.subr.bf16.mxu0 0
    %1785 = vmatpush1.bf16.xpose.msra.mxu0 %v978
    %1786 = vmatprep.subr.bf16.mxu0 0
    %1787 = vmatpush1.bf16.xpose.msra.mxu0 0
    %1788 = vmatprep.subr.bf16.mxu0 0
    %1789 = vmatpush1.bf16.xpose.msra.mxu0 0
    %1790 = vmatprep.subr.bf16.mxu0 0
    %1791 = vmatpush1.bf16.xpose.msra.mxu0 0
    %1792 = vmatprep.subr.bf16.mxu0 0
    %1793 = vmatpush1.bf16.xpose.msra.mxu0 0
    %1794 = vmatprep.subr.bf16.mxu0 0
    %1795 = vmatpush1.bf16.xpose.msra.mxu0 0
    %1796 = vmatprep.subr.bf16.mxu0 0
    %1797 = vmatpush1.bf16.xpose.msra.mxu0 0
    %1798 = vmatprep.subr.bf16.mxu0 0
    %1799 = vmatpush1.bf16.xpose.msra.mxu0 0
    %1800 = vmatprep.subr.bf16.mxu0 0
    %1801 = vmatpush1.bf16.xpose.msra.mxu0 0
    %1802 = vmatprep.subr.bf16.mxu0 0
    %1803 = vmatpush1.bf16.xpose.msra.mxu0 0
    %1804 = vmatprep.subr.bf16.mxu0 0
    %1805 = vmatpush1.bf16.xpose.msra.mxu0 0
    %1806 = vmatprep.subr.bf16.mxu0 0
    %1807 = vmatpush1.bf16.xpose.msra.mxu0 0
    %1808 = vmatprep.subr.bf16.mxu0 0
    %1809 = vmatpush1.bf16.xpose.msra.mxu0 0
    %1810 = vmatprep.subr.bf16.mxu0 0
    %1811 = vmatpush1.bf16.xpose.msra.mxu0 0
    %1812 = vmatprep.subr.bf16.mxu0 0
    %1813 = vmatpush1.bf16.xpose.msra.mxu0 0
    %1814 = vmatprep.mubr.bf16.mxu0 0
    %1815 = vmatmul.mubr.bf16.gmra.mrb[0].mxu0 %v1780
    %v1816 = vpop.f32.mrb[0].mxu0
    %v1817 = vadd.f32 %v965, %v1816
    %v1818 = vpop.f32.mrb[0].mxu0
    %v1819 = vpop.f32.mrb[0].mxu0
    %v1820 = vadd.f32 %v965, %v1819
    %v1821 = vpop.f32.mrb[0].mxu0
    %1822 = vdwg.mxu0
    %v1823 = vadd.f32 %v1713, %v1817
    %v1824 = vadd.f32 %v1714, %v1820
    %v1825 = vsel %vm157, %v1823, 0.0
    %1826 = vadd.xlane.f32.xlu0 %v1825
    %v1827 = vpop.xlane.xlu0 %1826
    %v1828 = vsel %vm157, %v1824, 0.0
    %1829 = vadd.xlane.f32.xlu0 %v1828
    %v1830 = vpop.xlane.xlu0 %1829
    %v1831 = vmul.f32 %v1827, %v164
    %v1832 = vmul.f32 %v1830, %v164
    %v1833 = vsub.f32 %v1823, %v1831
    %v1834 = vsub.f32 %v1824, %v1832
    %v1835 = vmul.f32 %v1833, %v1833
    %v1836 = vmul.f32 %v1834, %v1834
    %v1837 = vsel %vm157, %v1835, 0.0
    %1838 = vadd.xlane.f32.xlu0 %v1837
    %v1839 = vpop.xlane.xlu0 %1838
    %v1840 = vsel %vm157, %v1836, 0.0
    %1841 = vadd.xlane.f32.xlu0 %v1840
    %v1842 = vpop.xlane.xlu0 %1841
    %v1843 = vmul.f32 %v1839, %v164
    %v1844 = vmul.f32 %v1842, %v164
    %v1845 = vadd.f32 %v1843, 1e-12
    %v1846 = vadd.f32 %v1844, 1e-12
    %v1847 = vrsqrt.pop %v1845
    %v1848 = vrsqrt.pop %v1846
    %v1849 = vmul.f32 %v1833, %v1847
    %v1850 = vmul.f32 %v1834, %v1848
    %v1851 = vmul.f32 %v1849, %v1052
    %v1852 = vmul.f32 %v1850, %v1052
    %v1853 = vadd.f32 %v1851, %v1058
    %v1854 = vadd.f32 %v1852, %v1058
    %s1855 = scalar_lea.vmem [#allocation2], 16
    %1856 = vst.msk [vmem:[%s1855] sm:$0xff] %vm157, %v1853
    %1857 = vst.msk [vmem:[%s1855 + $0x8] sm:$0xff] %vm157, %v1854
    %v1858 = vpack.c.bf16 %v1854, %v1853
    %v1859 = vlaneseq
    %v1860 = vshrl.u32 %v1859, 7
    %v1861 = vsub.s32 2, %v1860
    %v1862 = vrot.slane %v26, %v1861
    %v1867 = vunpack.c.l.b16 %v30
    %v1868 = vunpack.c.l.b16 %v32
    %v1869 = vunpack.c.l.b16 %v34
    %v1870 = vunpack.c.l.b16 %v36
    %v1871 = vpack.c.b16 %v1868, %v1867
    %v1872 = vpack.c.b16 %v1870, %v1869
    %v1876 = vsel %vm157, %v1858, 0
    %1878 = vmatprep.subr.bf16.mxu0 0
    %1879 = vmatpush1.bf16.msra.mxu0 %v1871
    %1880 = vmatprep.subr.bf16.mxu0 0
    %1881 = vmatpush1.bf16.msra.mxu0 %v1872
    %1882 = vmatprep.subr.bf16.mxu0 0
    %1883 = vmatpush1.bf16.msra.mxu0 0
    %1884 = vmatprep.subr.bf16.mxu0 0
    %1885 = vmatpush1.bf16.msra.mxu0 0
    %1886 = vmatprep.subr.bf16.mxu0 0
    %1887 = vmatpush1.bf16.msra.mxu0 0
    %1888 = vmatprep.subr.bf16.mxu0 0
    %1889 = vmatpush1.bf16.msra.mxu0 0
    %1890 = vmatprep.subr.bf16.mxu0 0
    %1891 = vmatpush1.bf16.msra.mxu0 0
    %1892 = vmatprep.subr.bf16.mxu0 0
    %1893 = vmatpush1.bf16.msra.mxu0 0
    %1894 = vmatprep.subr.bf16.mxu0 0
    %1895 = vmatpush1.bf16.msra.mxu0 0
    %1896 = vmatprep.subr.bf16.mxu0 0
    %1897 = vmatpush1.bf16.msra.mxu0 0
    %1898 = vmatprep.subr.bf16.mxu0 0
    %1899 = vmatpush1.bf16.msra.mxu0 0
    %1900 = vmatprep.subr.bf16.mxu0 0
    %1901 = vmatpush1.bf16.msra.mxu0 0
    %1902 = vmatprep.subr.bf16.mxu0 0
    %1903 = vmatpush1.bf16.msra.mxu0 0
    %1904 = vmatprep.subr.bf16.mxu0 0
    %1905 = vmatpush1.bf16.msra.mxu0 0
    %1906 = vmatprep.subr.bf16.mxu0 0
    %1907 = vmatpush1.bf16.msra.mxu0 0
    %1908 = vmatprep.subr.bf16.mxu0 0
    %1909 = vmatpush1.bf16.msra.mxu0 0
    %1910 = vmatprep.mubr.bf16.mxu0 0
    %1911 = vmatmul.mubr.bf16.gmra.mrb[0].mxu0 %v1876
    %v1912 = vpop.f32.mrb[0].mxu0
    %v1913 = vadd.f32 %v1862, %v1912
    %v1914 = vpop.f32.mrb[0].mxu0
    %v1915 = vpop.f32.mrb[0].mxu0
    %v1916 = vadd.f32 %v1862, %v1915
    %v1917 = vpop.f32.mrb[0].mxu0
    %1918 = vdwg.mxu0
    %1919 = vst [vmem:[#allocation4] sm:$0xff] %v1913
    %1920 = vst [vmem:[#allocation4 + $0x8] sm:$0xff] %v1916
    // Predicated region
    $region22: #{tpu_custom_call.1} parent=1 // pred_check
      _
    $region23: #{tpu_custom_call.1} parent=1 // pred_check_branch
      %1922 = sbr.rel (0) target = $region25
    $region24: #{tpu_custom_call.1} parent=1 // pred_region
      %s1924 = ssub.s32 512, 512
      %1925 = vsyncadd [#allocation3], %s1924
      %s1926 = sshll.u32 [#allocation2], 4
      %s1927 = int_to_ptr.vmem [resolvable:$true] %s1926
      %1932 = dma.vmem_to_hbm [thread:$0]  %s1927, 512, %s5, [#allocation3], 128, 128, 8
    $region25: #{tpu_custom_call.1} parent=1 // pred_fallthru
      _
    // Predicated region
    $region26: #{tpu_custom_call.1} parent=1 // pred_check
      _
    $region27: #{tpu_custom_call.1} parent=1 // pred_check_branch
      %1934 = sbr.rel (0) target = $region29
    $region28: #{tpu_custom_call.1} parent=1 // pred_region
      %s1936 = ssub.s32 256, 256
      %1937 = vsyncadd [#allocation5], %s1936
      %s1938 = sshll.u32 [#allocation4], 4
      %s1939 = int_to_ptr.vmem [resolvable:$true] %s1938
      %1944 = dma.vmem_to_hbm [thread:$0]  %s1939, 256, %s6, [#allocation5], 128, 128, 8
    $region29: #{tpu_custom_call.1} parent=1 // pred_fallthru
      _
    // Predicated region
    $region30: #{tpu_custom_call.1} parent=1 // pred_check
      _
    $region31: #{tpu_custom_call.1} parent=1 // pred_check_branch
      %1946 = sbr.rel (0) target = $region33
    $region32: #{tpu_custom_call.1} parent=1 // pred_region
      %1947 = dma.done [#allocation3], 512
    $region33: #{tpu_custom_call.1} parent=1 // pred_fallthru
      _
    // Predicated region
    $region34: #{tpu_custom_call.1} parent=1 // pred_check
      _
    $region35: #{tpu_custom_call.1} parent=1 // pred_check_branch
      %1949 = sbr.rel (0) target = $region37
    $region36: #{tpu_custom_call.1} parent=1 // pred_region
      %1950 = dma.done [#allocation5], 256
    $region37: #{tpu_custom_call.1} parent=1 // pred_fallthru
      _
    %1951 = vsyncpa [#allocation3], 1
    %1952 = vsyncpa [#allocation5], 1

</llo_original>
